<compile_context>
chip_gen: v5e
topology: v5e:2x2
jax: 0.10.0
libtpu: 0.0.40
codegen_flags: <defaults>
</compile_context>

<pallas_src>
import jax
import jax.numpy as jnp
import numpy as np
from jax.experimental import pallas as pl
from jax.experimental.pallas import tpu as pltpu


# ------------------------------ fused kernel ------------------------------- #

def _lenet_kernel(x_ref, w1_ref, b1_ref, w2_ref, b2_ref,
                  fc1w_ref, fc1b_ref, fc2w_ref, fc2b_ref, fc3w_ref, fc3b_ref,
                  o_ref, q1_ref, q2_ref):
    BT = x_ref.shape[0]
    K = 5

    # ---- conv1 (1->6, k=5) + sigmoid: 5 accumulating Toeplitz MXU matmuls.
    # Output lane layout: (w % 2) * 128 + (w // 2) * 6 + c   (w=0..23, c=0..5),
    # i.e. the two w-parities live in separate 128-lane halves.
    acc1 = jnp.zeros((BT * 24, 256), jnp.float32)
    for kh in range(K):
        a = x_ref[:, kh:kh + 24, :].reshape(BT * 24, 28)
        acc1 = acc1 + jnp.dot(a, w1_ref[kh], preferred_element_type=jnp.float32)
    y1 = jax.nn.sigmoid(acc1 + b1_ref[...])                     # (BT*24, 256)

    # ---- pool1, W direction: parity halves -> one free vreg maximum.
    q1_ref[...] = jnp.maximum(y1[:, :128], y1[:, 128:]).reshape(BT, 24, 128)

    # ---- conv2 (6->16, k=5) + sigmoid: 5 accumulating Toeplitz matmuls.
    # pool1's H-direction pair-max is folded into the row gather: two
    # sublane-strided reads + max per kh (lane layout of the output columns:
    # (j % 2) * 128 + (j // 2) * 16 + co).
    acc2 = jnp.zeros((BT * 8, 256), jnp.float32)
    for kh in range(K):
        lo = q1_ref[:, pl.ds(2 * kh, 8, stride=2), :]           # rows 2kh, 2kh+2, ...
        hi = q1_ref[:, pl.ds(2 * kh + 1, 8, stride=2), :]       # rows 2kh+1, 2kh+3, ...
        a2 = jnp.maximum(lo, hi).reshape(BT * 8, 128)
        acc2 = acc2 + jnp.dot(a2, w2_ref[kh], preferred_element_type=jnp.float32)
    y2 = jax.nn.sigmoid(acc2 + b2_ref[...])                     # (BT*8, 256)

    # ---- pool2, W direction (free half max) -> lane-dense scratch.
    q2_ref[...] = jnp.maximum(y2[:, :128], y2[:, 128:]).reshape(BT, 8, 128)

    # ---- pool2 H + flatten + fc1, fused: 4 accumulating K=128 matmuls.
    # The torch NCHW flatten permutation is folded into fc1w's blocks.
    h1 = fc1b_ref[...]                                          # (1,120) -> bcast
    for m in range(4):
        feat = jnp.maximum(q2_ref[:, 2 * m, :], q2_ref[:, 2 * m + 1, :])  # (BT,128)
        h1 = h1 + jnp.dot(feat, fc1w_ref[m], preferred_element_type=jnp.float32)
    h1 = jax.nn.sigmoid(h1)                                     # (BT, 120)

    # ---- fc2 + fc3 (fc3 zero-padded to 128 lanes for a lane-dense store).
    h2 = jax.nn.sigmoid(
        jnp.dot(h1, fc2w_ref[...], preferred_element_type=jnp.float32)
        + fc2b_ref[...])                                        # (BT, 84)
    out = (jnp.dot(h2, fc3w_ref[...], preferred_element_type=jnp.float32)
           + fc3b_ref[...])                                     # (BT, 128)
    o_ref[...] = out.astype(o_ref.dtype)


def _full_spec(shape):
    n = len(shape)
    return pl.BlockSpec(shape, lambda i, _n=n: (0,) * _n)


def lenet_pallas_forward(x_nchw, kp):
    """x_nchw: (B, 1, 28, 28) float32, kp: prepared (kernel-layout) params."""
    B = x_nchw.shape[0]
    # Batch tile: whole batch at small sizes, 64-row tiles for larger batches
    # (keeps per-step VMEM well under the 32 MiB scoped limit on every chip
    # while giving the MXU a decent M and v7x a >=2-step parallel grid).
    BT = B if B <= 64 else 64
    assert B % BT == 0, "batch must be divisible by the batch tile"

    x = x_nchw[:, 0, :, :].astype(jnp.float32)      # squeeze Cin=1 -> (B, 28, 28)

    out_padded = pl.pallas_call(
        _lenet_kernel,
        out_shape=jax.ShapeDtypeStruct((B, 128), jnp.float32),
        grid=(B // BT,),
        in_specs=[
            pl.BlockSpec((BT, 28, 28), lambda i: (i, 0, 0)),
            _full_spec((5, 28, 256)),      # conv1 Toeplitz slabs
            _full_spec((1, 256)),          # conv1 bias tile
            _full_spec((5, 128, 256)),     # conv2 Toeplitz slabs
            _full_spec((1, 256)),          # conv2 bias tile
            _full_spec((4, 128, 120)),     # fc1 per-row blocks (flatten folded)
            _full_spec((1, 120)),
            _full_spec((120, 84)),
            _full_spec((1, 84)),
            _full_spec((84, 128)),         # fc3 padded to 128 lanes
            _full_spec((1, 128)),
        ],
        out_specs=pl.BlockSpec((BT, 128), lambda i: (i, 0)),
        scratch_shapes=[pltpu.VMEM((BT, 24, 128), jnp.float32),   # pool1 staging
                        pltpu.VMEM((BT, 8, 128), jnp.float32)],   # pool2 staging
        compiler_params=pltpu.CompilerParams(
            dimension_semantics=("parallel",),
            vmem_limit_bytes=32 * 1024 * 1024),
    )(x, kp["w1"], kp["b1"], kp["w2"], kp["b2"],
      kp["fc1_w"], kp["fc1_b"], kp["fc2_w"], kp["fc2_b"],
      kp["fc3_w"], kp["fc3_b"])
    return out_padded[:, :10]


lenet_forward = jax.jit(lenet_pallas_forward)


# -------------------- parameters (torch layout + one-time prep) ------------ #

def init_params(key):
    # Shapes follow the PyTorch module exactly (NCHW conv weights, (out,in) FC).
    ks = jax.random.split(key, 10)

    def rnd(k, shape, scale):
        return (scale * jax.random.normal(k, shape)).astype(jnp.float32)

    return {
        "conv1_w": rnd(ks[0], (6, 1, 5, 5), 0.2),
        "conv1_b": rnd(ks[1], (6,), 0.1),
        "conv2_w": rnd(ks[2], (16, 6, 5, 5), 0.1),
        "conv2_b": rnd(ks[3], (16,), 0.1),
        "fc1_w": rnd(ks[4], (120, 256), 0.05),
        "fc1_b": rnd(ks[5], (120,), 0.05),
        "fc2_w": rnd(ks[6], (84, 120), 0.05),
        "fc2_b": rnd(ks[7], (84,), 0.05),
        "fc3_w": rnd(ks[8], (10, 84), 0.05),
        "fc3_b": rnd(ks[9], (10,), 0.05),
    }


def prepare_params(p):
    """One-time host-side re-layout of the torch weights into kernel layouts."""
    conv1_w = np.asarray(p["conv1_w"], np.float32)   # (6,1,5,5)
    conv1_b = np.asarray(p["conv1_b"], np.float32)   # (6,)
    conv2_w = np.asarray(p["conv2_w"], np.float32)   # (16,6,5,5)
    conv2_b = np.asarray(p["conv2_b"], np.float32)   # (16,)
    fc1_w = np.asarray(p["fc1_w"], np.float32)       # (120,256)
    fc2_w = np.asarray(p["fc2_w"], np.float32)       # (84,120)
    fc3_w = np.asarray(p["fc3_w"], np.float32)       # (10,84)

    # conv1 Toeplitz slabs: w1t[kh, win, L], L = (w%2)*128 + (w//2)*6 + c.
    w1t = np.zeros((5, 28, 256), np.float32)
    b1t = np.zeros((1, 256), np.float32)
    for w in range(24):
        L0 = (w % 2) * 128 + (w // 2) * 6
        b1t[0, L0:L0 + 6] = conv1_b
        for kh in range(5):
            for kw in range(5):
                w1t[kh, w + kw, L0:L0 + 6] = conv1_w[:, 0, kh, kw]

    # conv2 Toeplitz slabs: w2t[kh, u*6+ci, M], M = (j%2)*128 + (j//2)*16 + co.
    w2t = np.zeros((5, 128, 256), np.float32)
    b2t = np.zeros((1, 256), np.float32)
    for j in range(8):
        M0 = (j % 2) * 128 + (j // 2) * 16
        b2t[0, M0:M0 + 16] = conv2_b
        for kh in range(5):
            for kw in range(5):
                u = j + kw
                w2t[kh, u * 6:u * 6 + 6, M0:M0 + 16] = conv2_w[:, :, kh, kw].T

    # fc1: fold torch's NCHW flatten (f = co*16 + m*4 + n) into per-m blocks
    # whose rows follow the pooled-feature lane layout n*16 + co.
    fc1w = np.zeros((4, 128, 120), np.float32)
    for m in range(4):
        for n in range(4):
            for co in range(16):
                fc1w[m, n * 16 + co, :] = fc1_w[:, co * 16 + m * 4 + n]

    # fc3 zero-padded to 128 output lanes (lane-dense final store).
    fc3w = np.zeros((84, 128), np.float32)
    fc3w[:, :10] = fc3_w.T
    fc3b = np.zeros((1, 128), np.float32)
    fc3b[0, :10] = np.asarray(p["fc3_b"], np.float32)

    return {
        "w1": jnp.asarray(w1t), "b1": jnp.asarray(b1t),
        "w2": jnp.asarray(w2t), "b2": jnp.asarray(b2t),
        "fc1_w": jnp.asarray(fc1w),
        "fc1_b": jnp.asarray(np.asarray(p["fc1_b"], np.float32).reshape(1, 120)),
        "fc2_w": jnp.asarray(fc2_w.T),
        "fc2_b": jnp.asarray(np.asarray(p["fc2_b"], np.float32).reshape(1, 84)),
        "fc3_w": jnp.asarray(fc3w), "fc3_b": jnp.asarray(fc3b),
    }


# ----------------------------- pure-JAX reference -------------------------- #

def lenet_reference(x, p):
    dn = ("NCHW", "OIHW", "NCHW")
    hi = jax.lax.Precision.HIGHEST
    y = jax.lax.conv_general_dilated(x, p["conv1_w"], (1, 1), "VALID",
                                     dimension_numbers=dn, precision=hi)
    y = jax.nn.sigmoid(y + p["conv1_b"][None, :, None, None])
    y = jax.lax.reduce_window(y, -jnp.inf, jax.lax.max,
                              (1, 1, 2, 2), (1, 1, 2, 2), "VALID")
    y = jax.lax.conv_general_dilated(y, p["conv2_w"], (1, 1), "VALID",
                                     dimension_numbers=dn, precision=hi)
    y = jax.nn.sigmoid(y + p["conv2_b"][None, :, None, None])
    y = jax.lax.reduce_window(y, -jnp.inf, jax.lax.max,
                              (1, 1, 2, 2), (1, 1, 2, 2), "VALID")
    f = y.reshape(x.shape[0], -1)
    h = jax.nn.sigmoid(jnp.dot(f, p["fc1_w"].T, precision=hi) + p["fc1_b"])
    h = jax.nn.sigmoid(jnp.dot(h, p["fc2_w"].T, precision=hi) + p["fc2_b"])
    return jnp.dot(h, p["fc3_w"].T, precision=hi) + p["fc3_b"]


# ----------------------------------- main ----------------------------------- #

if __name__ == "__main__":
    key = jax.random.PRNGKey(0)
    k_x, k_p = jax.random.split(key)
    # FashionMNIST-shaped input (28x28 so the 16*4*4 flatten matches the module)
    x = jax.random.normal(k_x, (2, 1, 28, 28), dtype=jnp.float32)   # NCHW
    params = init_params(k_p)
    kparams = prepare_params(params)

    out = lenet_forward(x, kparams)
    out = jax.block_until_ready(out)
    assert out.shape == (2, 10) and out.dtype == jnp.float32

    ref = lenet_reference(x, params)
    err = float(jnp.max(jnp.abs(out - ref)))
    assert jnp.allclose(out, ref, atol=5e-3, rtol=5e-3), f"max abs err {err}"

    print("KERNEL_OK")
</pallas_src>

<mosaic_0001>
module attributes {stable_mosaic.version = 11 : i64} {
  func.func @_lenet_kernel(%arg0: i32, %arg1: memref<2x28x28xf32, #tpu.memory_space<vmem>>, %arg2: memref<5x28x256xf32, #tpu.memory_space<vmem>>, %arg3: memref<1x256xf32, #tpu.memory_space<vmem>>, %arg4: memref<5x128x256xf32, #tpu.memory_space<vmem>>, %arg5: memref<1x256xf32, #tpu.memory_space<vmem>>, %arg6: memref<4x128x120xf32, #tpu.memory_space<vmem>>, %arg7: memref<1x120xf32, #tpu.memory_space<vmem>>, %arg8: memref<120x84xf32, #tpu.memory_space<vmem>>, %arg9: memref<1x84xf32, #tpu.memory_space<vmem>>, %arg10: memref<84x128xf32, #tpu.memory_space<vmem>>, %arg11: memref<1x128xf32, #tpu.memory_space<vmem>>, %arg12: memref<2x128xf32, #tpu.memory_space<vmem>>, %arg13: memref<2x24x128xf32, #tpu.memory_space<vmem>>, %arg14: memref<2x8x128xf32, #tpu.memory_space<vmem>>) attributes {dimension_semantics = [#tpu.dimension_semantics<parallel>], iteration_bounds = array<i64: 1>, scalar_prefetch = 0 : i64, scratch_operands = 2 : i64, tpu.core_type = #tpu.core_type<tc>, window_params = [{transform_indices = @transform_0, window_bounds = array<i64: 2, 28, 28>}, {pipeline_mode = #tpu.pipeline_mode<synchronous>, transform_indices = @transform_1, window_bounds = array<i64: 5, 28, 256>}, {pipeline_mode = #tpu.pipeline_mode<synchronous>, transform_indices = @transform_2, window_bounds = array<i64: 1, 256>}, {pipeline_mode = #tpu.pipeline_mode<synchronous>, transform_indices = @transform_3, window_bounds = array<i64: 5, 128, 256>}, {pipeline_mode = #tpu.pipeline_mode<synchronous>, transform_indices = @transform_4, window_bounds = array<i64: 1, 256>}, {pipeline_mode = #tpu.pipeline_mode<synchronous>, transform_indices = @transform_5, window_bounds = array<i64: 4, 128, 120>}, {pipeline_mode = #tpu.pipeline_mode<synchronous>, transform_indices = @transform_6, window_bounds = array<i64: 1, 120>}, {pipeline_mode = #tpu.pipeline_mode<synchronous>, transform_indices = @transform_7, window_bounds = array<i64: 120, 84>}, {pipeline_mode = #tpu.pipeline_mode<synchronous>, transform_indices = @transform_8, window_bounds = array<i64: 1, 84>}, {pipeline_mode = #tpu.pipeline_mode<synchronous>, transform_indices = @transform_9, window_bounds = array<i64: 84, 128>}, {pipeline_mode = #tpu.pipeline_mode<synchronous>, transform_indices = @transform_10, window_bounds = array<i64: 1, 128>}, {transform_indices = @transform_11, window_bounds = array<i64: 2, 128>}]} {
    %cst = arith.constant 0.000000e+00 : f32
    %0 = vector.broadcast %cst : f32 to vector<48x256xf32>
    %c0 = arith.constant 0 : index
    %c0_0 = arith.constant 0 : index
    %c0_1 = arith.constant 0 : index
    %1 = vector.load %arg1[%c0, %c0_0, %c0_1] : memref<2x28x28xf32, #tpu.memory_space<vmem>>, vector<2x24x28xf32>
    %2 = vector.shape_cast %1 : vector<2x24x28xf32> to vector<48x28xf32>
    %c0_2 = arith.constant 0 : index
    %c0_3 = arith.constant 0 : index
    %c0_4 = arith.constant 0 : index
    %3 = vector.load %arg2[%c0_2, %c0_3, %c0_4] : memref<5x28x256xf32, #tpu.memory_space<vmem>>, vector<1x28x256xf32>
    %4 = vector.shape_cast %3 : vector<1x28x256xf32> to vector<28x256xf32>
    %cst_5 = arith.constant dense<0.000000e+00> : vector<48x256xf32>
    %5 = tpu.matmul %2, %4, %cst_5 {dimension_numbers = #tpu.dot_dimension_numbers<[1], [0], [0], [1], [0, 0, 1, 1], [], []>} : vector<48x28xf32>, vector<28x256xf32>, vector<48x256xf32> -> vector<48x256xf32>
    %6 = arith.addf %0, %5 : vector<48x256xf32>
    %c0_6 = arith.constant 0 : index
    %c1 = arith.constant 1 : index
    %c0_7 = arith.constant 0 : index
    %7 = vector.load %arg1[%c0_6, %c1, %c0_7] : memref<2x28x28xf32, #tpu.memory_space<vmem>>, vector<2x24x28xf32>
    %8 = vector.shape_cast %7 : vector<2x24x28xf32> to vector<48x28xf32>
    %c1_8 = arith.constant 1 : index
    %c0_9 = arith.constant 0 : index
    %c0_10 = arith.constant 0 : index
    %9 = vector.load %arg2[%c1_8, %c0_9, %c0_10] : memref<5x28x256xf32, #tpu.memory_space<vmem>>, vector<1x28x256xf32>
    %10 = vector.shape_cast %9 : vector<1x28x256xf32> to vector<28x256xf32>
    %cst_11 = arith.constant dense<0.000000e+00> : vector<48x256xf32>
    %11 = tpu.matmul %8, %10, %cst_11 {dimension_numbers = #tpu.dot_dimension_numbers<[1], [0], [0], [1], [0, 0, 1, 1], [], []>} : vector<48x28xf32>, vector<28x256xf32>, vector<48x256xf32> -> vector<48x256xf32>
    %12 = arith.addf %6, %11 : vector<48x256xf32>
    %c0_12 = arith.constant 0 : index
    %c2 = arith.constant 2 : index
    %c0_13 = arith.constant 0 : index
    %13 = vector.load %arg1[%c0_12, %c2, %c0_13] : memref<2x28x28xf32, #tpu.memory_space<vmem>>, vector<2x24x28xf32>
    %14 = vector.shape_cast %13 : vector<2x24x28xf32> to vector<48x28xf32>
    %c2_14 = arith.constant 2 : index
    %c0_15 = arith.constant 0 : index
    %c0_16 = arith.constant 0 : index
    %15 = vector.load %arg2[%c2_14, %c0_15, %c0_16] : memref<5x28x256xf32, #tpu.memory_space<vmem>>, vector<1x28x256xf32>
    %16 = vector.shape_cast %15 : vector<1x28x256xf32> to vector<28x256xf32>
    %cst_17 = arith.constant dense<0.000000e+00> : vector<48x256xf32>
    %17 = tpu.matmul %14, %16, %cst_17 {dimension_numbers = #tpu.dot_dimension_numbers<[1], [0], [0], [1], [0, 0, 1, 1], [], []>} : vector<48x28xf32>, vector<28x256xf32>, vector<48x256xf32> -> vector<48x256xf32>
    %18 = arith.addf %12, %17 : vector<48x256xf32>
    %c0_18 = arith.constant 0 : index
    %c3 = arith.constant 3 : index
    %c0_19 = arith.constant 0 : index
    %19 = vector.load %arg1[%c0_18, %c3, %c0_19] : memref<2x28x28xf32, #tpu.memory_space<vmem>>, vector<2x24x28xf32>
    %20 = vector.shape_cast %19 : vector<2x24x28xf32> to vector<48x28xf32>
    %c3_20 = arith.constant 3 : index
    %c0_21 = arith.constant 0 : index
    %c0_22 = arith.constant 0 : index
    %21 = vector.load %arg2[%c3_20, %c0_21, %c0_22] : memref<5x28x256xf32, #tpu.memory_space<vmem>>, vector<1x28x256xf32>
    %22 = vector.shape_cast %21 : vector<1x28x256xf32> to vector<28x256xf32>
    %cst_23 = arith.constant dense<0.000000e+00> : vector<48x256xf32>
    %23 = tpu.matmul %20, %22, %cst_23 {dimension_numbers = #tpu.dot_dimension_numbers<[1], [0], [0], [1], [0, 0, 1, 1], [], []>} : vector<48x28xf32>, vector<28x256xf32>, vector<48x256xf32> -> vector<48x256xf32>
    %24 = arith.addf %18, %23 : vector<48x256xf32>
    %c0_24 = arith.constant 0 : index
    %c4 = arith.constant 4 : index
    %c0_25 = arith.constant 0 : index
    %25 = vector.load %arg1[%c0_24, %c4, %c0_25] : memref<2x28x28xf32, #tpu.memory_space<vmem>>, vector<2x24x28xf32>
    %26 = vector.shape_cast %25 : vector<2x24x28xf32> to vector<48x28xf32>
    %c4_26 = arith.constant 4 : index
    %c0_27 = arith.constant 0 : index
    %c0_28 = arith.constant 0 : index
    %27 = vector.load %arg2[%c4_26, %c0_27, %c0_28] : memref<5x28x256xf32, #tpu.memory_space<vmem>>, vector<1x28x256xf32>
    %28 = vector.shape_cast %27 : vector<1x28x256xf32> to vector<28x256xf32>
    %cst_29 = arith.constant dense<0.000000e+00> : vector<48x256xf32>
    %29 = tpu.matmul %26, %28, %cst_29 {dimension_numbers = #tpu.dot_dimension_numbers<[1], [0], [0], [1], [0, 0, 1, 1], [], []>} : vector<48x28xf32>, vector<28x256xf32>, vector<48x256xf32> -> vector<48x256xf32>
    %30 = arith.addf %24, %29 : vector<48x256xf32>
    %c0_30 = arith.constant 0 : index
    %c0_31 = arith.constant 0 : index
    %31 = vector.load %arg3[%c0_30, %c0_31] : memref<1x256xf32, #tpu.memory_space<vmem>>, vector<1x256xf32>
    %32 = vector.broadcast %31 : vector<1x256xf32> to vector<48x256xf32>
    %33 = arith.addf %30, %32 : vector<48x256xf32>
    %34 = arith.negf %33 : vector<48x256xf32>
    %35 = math.exp %34 : vector<48x256xf32>
    %cst_32 = arith.constant 1.000000e+00 : f32
    %36 = vector.broadcast %cst_32 : f32 to vector<48x256xf32>
    %37 = arith.addf %36, %35 : vector<48x256xf32>
    %38 = arith.divf %36, %37 : vector<48x256xf32>
    %39 = vector.extract_strided_slice %38 {offsets = [0, 0], sizes = [48, 128], strides = [1, 1]} : vector<48x256xf32> to vector<48x128xf32>
    %40 = vector.extract_strided_slice %38 {offsets = [0, 128], sizes = [48, 128], strides = [1, 1]} : vector<48x256xf32> to vector<48x128xf32>
    %41 = arith.maximumf %39, %40 : vector<48x128xf32>
    %42 = vector.shape_cast %41 : vector<48x128xf32> to vector<2x24x128xf32>
    %c0_33 = arith.constant 0 : index
    %c0_34 = arith.constant 0 : index
    %c0_35 = arith.constant 0 : index
    %43 = vector.load %arg13[%c0_33, %c0_34, %c0_35] : memref<2x24x128xf32, #tpu.memory_space<vmem>>, vector<2x24x128xf32>
    tpu.vector_store %arg13[%c0_33, %c0_34, %c0_35], %42 {strides = array<i32>} : memref<2x24x128xf32, #tpu.memory_space<vmem>>, vector<2x24x128xf32>,
    %cst_36 = arith.constant 0.000000e+00 : f32
    %44 = vector.broadcast %cst_36 : f32 to vector<16x256xf32>
    %c0_37 = arith.constant 0 : index
    %c0_38 = arith.constant 0 : index
    %c0_39 = arith.constant 0 : index
    %45 = tpu.strided_load %arg13[%c0_37, %c0_38, %c0_39] {strides = array<i32: 1, 2, 1>} : memref<2x24x128xf32, #tpu.memory_space<vmem>>, vector<2x8x128xf32>
    %c0_40 = arith.constant 0 : index
    %c1_41 = arith.constant 1 : index
    %c0_42 = arith.constant 0 : index
    %46 = tpu.strided_load %arg13[%c0_40, %c1_41, %c0_42] {strides = array<i32: 1, 2, 1>} : memref<2x24x128xf32, #tpu.memory_space<vmem>>, vector<2x8x128xf32>
    %47 = arith.maximumf %45, %46 : vector<2x8x128xf32>
    %48 = vector.shape_cast %47 : vector<2x8x128xf32> to vector<16x128xf32>
    %c0_43 = arith.constant 0 : index
    %c0_44 = arith.constant 0 : index
    %c0_45 = arith.constant 0 : index
    %49 = vector.load %arg4[%c0_43, %c0_44, %c0_45] : memref<5x128x256xf32, #tpu.memory_space<vmem>>, vector<1x128x256xf32>
    %50 = vector.shape_cast %49 : vector<1x128x256xf32> to vector<128x256xf32>
    %cst_46 = arith.constant dense<0.000000e+00> : vector<16x256xf32>
    %51 = tpu.matmul %48, %50, %cst_46 {dimension_numbers = #tpu.dot_dimension_numbers<[1], [0], [0], [1], [0, 0, 1, 1], [], []>} : vector<16x128xf32>, vector<128x256xf32>, vector<16x256xf32> -> vector<16x256xf32>
    %52 = arith.addf %44, %51 : vector<16x256xf32>
    %c0_47 = arith.constant 0 : index
    %c2_48 = arith.constant 2 : index
    %c0_49 = arith.constant 0 : index
    %53 = tpu.strided_load %arg13[%c0_47, %c2_48, %c0_49] {strides = array<i32: 1, 2, 1>} : memref<2x24x128xf32, #tpu.memory_space<vmem>>, vector<2x8x128xf32>
    %c0_50 = arith.constant 0 : index
    %c3_51 = arith.constant 3 : index
    %c0_52 = arith.constant 0 : index
    %54 = tpu.strided_load %arg13[%c0_50, %c3_51, %c0_52] {strides = array<i32: 1, 2, 1>} : memref<2x24x128xf32, #tpu.memory_space<vmem>>, vector<2x8x128xf32>
    %55 = arith.maximumf %53, %54 : vector<2x8x128xf32>
    %56 = vector.shape_cast %55 : vector<2x8x128xf32> to vector<16x128xf32>
    %c1_53 = arith.constant 1 : index
    %c0_54 = arith.constant 0 : index
    %c0_55 = arith.constant 0 : index
    %57 = vector.load %arg4[%c1_53, %c0_54, %c0_55] : memref<5x128x256xf32, #tpu.memory_space<vmem>>, vector<1x128x256xf32>
    %58 = vector.shape_cast %57 : vector<1x128x256xf32> to vector<128x256xf32>
    %cst_56 = arith.constant dense<0.000000e+00> : vector<16x256xf32>
    %59 = tpu.matmul %56, %58, %cst_56 {dimension_numbers = #tpu.dot_dimension_numbers<[1], [0], [0], [1], [0, 0, 1, 1], [], []>} : vector<16x128xf32>, vector<128x256xf32>, vector<16x256xf32> -> vector<16x256xf32>
    %60 = arith.addf %52, %59 : vector<16x256xf32>
    %c0_57 = arith.constant 0 : index
    %c4_58 = arith.constant 4 : index
    %c0_59 = arith.constant 0 : index
    %61 = tpu.strided_load %arg13[%c0_57, %c4_58, %c0_59] {strides = array<i32: 1, 2, 1>} : memref<2x24x128xf32, #tpu.memory_space<vmem>>, vector<2x8x128xf32>
    %c0_60 = arith.constant 0 : index
    %c5 = arith.constant 5 : index
    %c0_61 = arith.constant 0 : index
    %62 = tpu.strided_load %arg13[%c0_60, %c5, %c0_61] {strides = array<i32: 1, 2, 1>} : memref<2x24x128xf32, #tpu.memory_space<vmem>>, vector<2x8x128xf32>
    %63 = arith.maximumf %61, %62 : vector<2x8x128xf32>
    %64 = vector.shape_cast %63 : vector<2x8x128xf32> to vector<16x128xf32>
    %c2_62 = arith.constant 2 : index
    %c0_63 = arith.constant 0 : index
    %c0_64 = arith.constant 0 : index
    %65 = vector.load %arg4[%c2_62, %c0_63, %c0_64] : memref<5x128x256xf32, #tpu.memory_space<vmem>>, vector<1x128x256xf32>
    %66 = vector.shape_cast %65 : vector<1x128x256xf32> to vector<128x256xf32>
    %cst_65 = arith.constant dense<0.000000e+00> : vector<16x256xf32>
    %67 = tpu.matmul %64, %66, %cst_65 {dimension_numbers = #tpu.dot_dimension_numbers<[1], [0], [0], [1], [0, 0, 1, 1], [], []>} : vector<16x128xf32>, vector<128x256xf32>, vector<16x256xf32> -> vector<16x256xf32>
    %68 = arith.addf %60, %67 : vector<16x256xf32>
    %c0_66 = arith.constant 0 : index
    %c6 = arith.constant 6 : index
    %c0_67 = arith.constant 0 : index
    %69 = tpu.strided_load %arg13[%c0_66, %c6, %c0_67] {strides = array<i32: 1, 2, 1>} : memref<2x24x128xf32, #tpu.memory_space<vmem>>, vector<2x8x128xf32>
    %c0_68 = arith.constant 0 : index
    %c7 = arith.constant 7 : index
    %c0_69 = arith.constant 0 : index
    %70 = tpu.strided_load %arg13[%c0_68, %c7, %c0_69] {strides = array<i32: 1, 2, 1>} : memref<2x24x128xf32, #tpu.memory_space<vmem>>, vector<2x8x128xf32>
    %71 = arith.maximumf %69, %70 : vector<2x8x128xf32>
    %72 = vector.shape_cast %71 : vector<2x8x128xf32> to vector<16x128xf32>
    %c3_70 = arith.constant 3 : index
    %c0_71 = arith.constant 0 : index
    %c0_72 = arith.constant 0 : index
    %73 = vector.load %arg4[%c3_70, %c0_71, %c0_72] : memref<5x128x256xf32, #tpu.memory_space<vmem>>, vector<1x128x256xf32>
    %74 = vector.shape_cast %73 : vector<1x128x256xf32> to vector<128x256xf32>
    %cst_73 = arith.constant dense<0.000000e+00> : vector<16x256xf32>
    %75 = tpu.matmul %72, %74, %cst_73 {dimension_numbers = #tpu.dot_dimension_numbers<[1], [0], [0], [1], [0, 0, 1, 1], [], []>} : vector<16x128xf32>, vector<128x256xf32>, vector<16x256xf32> -> vector<16x256xf32>
    %76 = arith.addf %68, %75 : vector<16x256xf32>
    %c0_74 = arith.constant 0 : index
    %c8 = arith.constant 8 : index
    %c0_75 = arith.constant 0 : index
    %77 = tpu.strided_load %arg13[%c0_74, %c8, %c0_75] {strides = array<i32: 1, 2, 1>} : memref<2x24x128xf32, #tpu.memory_space<vmem>>, vector<2x8x128xf32>
    %c0_76 = arith.constant 0 : index
    %c9 = arith.constant 9 : index
    %c0_77 = arith.constant 0 : index
    %78 = tpu.strided_load %arg13[%c0_76, %c9, %c0_77] {strides = array<i32: 1, 2, 1>} : memref<2x24x128xf32, #tpu.memory_space<vmem>>, vector<2x8x128xf32>
    %79 = arith.maximumf %77, %78 : vector<2x8x128xf32>
    %80 = vector.shape_cast %79 : vector<2x8x128xf32> to vector<16x128xf32>
    %c4_78 = arith.constant 4 : index
    %c0_79 = arith.constant 0 : index
    %c0_80 = arith.constant 0 : index
    %81 = vector.load %arg4[%c4_78, %c0_79, %c0_80] : memref<5x128x256xf32, #tpu.memory_space<vmem>>, vector<1x128x256xf32>
    %82 = vector.shape_cast %81 : vector<1x128x256xf32> to vector<128x256xf32>
    %cst_81 = arith.constant dense<0.000000e+00> : vector<16x256xf32>
    %83 = tpu.matmul %80, %82, %cst_81 {dimension_numbers = #tpu.dot_dimension_numbers<[1], [0], [0], [1], [0, 0, 1, 1], [], []>} : vector<16x128xf32>, vector<128x256xf32>, vector<16x256xf32> -> vector<16x256xf32>
    %84 = arith.addf %76, %83 : vector<16x256xf32>
    %c0_82 = arith.constant 0 : index
    %c0_83 = arith.constant 0 : index
    %85 = vector.load %arg5[%c0_82, %c0_83] : memref<1x256xf32, #tpu.memory_space<vmem>>, vector<1x256xf32>
    %86 = vector.broadcast %85 : vector<1x256xf32> to vector<16x256xf32>
    %87 = arith.addf %84, %86 : vector<16x256xf32>
    %88 = arith.negf %87 : vector<16x256xf32>
    %89 = math.exp %88 : vector<16x256xf32>
    %cst_84 = arith.constant 1.000000e+00 : f32
    %90 = vector.broadcast %cst_84 : f32 to vector<16x256xf32>
    %91 = arith.addf %90, %89 : vector<16x256xf32>
    %92 = arith.divf %90, %91 : vector<16x256xf32>
    %93 = vector.extract_strided_slice %92 {offsets = [0, 0], sizes = [16, 128], strides = [1, 1]} : vector<16x256xf32> to vector<16x128xf32>
    %94 = vector.extract_strided_slice %92 {offsets = [0, 128], sizes = [16, 128], strides = [1, 1]} : vector<16x256xf32> to vector<16x128xf32>
    %95 = arith.maximumf %93, %94 : vector<16x128xf32>
    %96 = vector.shape_cast %95 : vector<16x128xf32> to vector<2x8x128xf32>
    %c0_85 = arith.constant 0 : index
    %c0_86 = arith.constant 0 : index
    %c0_87 = arith.constant 0 : index
    %97 = vector.load %arg14[%c0_85, %c0_86, %c0_87] : memref<2x8x128xf32, #tpu.memory_space<vmem>>, vector<2x8x128xf32>
    tpu.vector_store %arg14[%c0_85, %c0_86, %c0_87], %96 {strides = array<i32>} : memref<2x8x128xf32, #tpu.memory_space<vmem>>, vector<2x8x128xf32>,
    %c0_88 = arith.constant 0 : index
    %c0_89 = arith.constant 0 : index
    %98 = vector.load %arg7[%c0_88, %c0_89] : memref<1x120xf32, #tpu.memory_space<vmem>>, vector<1x120xf32>
    %c0_90 = arith.constant 0 : index
    %c0_91 = arith.constant 0 : index
    %c0_92 = arith.constant 0 : index
    %99 = vector.load %arg14[%c0_90, %c0_91, %c0_92] : memref<2x8x128xf32, #tpu.memory_space<vmem>>, vector<2x1x128xf32>
    %100 = vector.shape_cast %99 : vector<2x1x128xf32> to vector<2x128xf32>
    %c0_93 = arith.constant 0 : index
    %c1_94 = arith.constant 1 : index
    %c0_95 = arith.constant 0 : index
    %101 = vector.load %arg14[%c0_93, %c1_94, %c0_95] : memref<2x8x128xf32, #tpu.memory_space<vmem>>, vector<2x1x128xf32>
    %102 = vector.shape_cast %101 : vector<2x1x128xf32> to vector<2x128xf32>
    %103 = arith.maximumf %100, %102 : vector<2x128xf32>
    %c0_96 = arith.constant 0 : index
    %c0_97 = arith.constant 0 : index
    %c0_98 = arith.constant 0 : index
    %104 = vector.load %arg6[%c0_96, %c0_97, %c0_98] : memref<4x128x120xf32, #tpu.memory_space<vmem>>, vector<1x128x120xf32>
    %105 = vector.shape_cast %104 : vector<1x128x120xf32> to vector<128x120xf32>
    %cst_99 = arith.constant dense<0.000000e+00> : vector<2x120xf32>
    %106 = tpu.matmul %103, %105, %cst_99 {dimension_numbers = #tpu.dot_dimension_numbers<[1], [0], [0], [1], [0, 0, 1, 1], [], []>} : vector<2x128xf32>, vector<128x120xf32>, vector<2x120xf32> -> vector<2x120xf32>
    %107 = vector.broadcast %98 : vector<1x120xf32> to vector<2x120xf32>
    %108 = arith.addf %107, %106 : vector<2x120xf32>
    %c0_100 = arith.constant 0 : index
    %c2_101 = arith.constant 2 : index
    %c0_102 = arith.constant 0 : index
    %109 = vector.load %arg14[%c0_100, %c2_101, %c0_102] : memref<2x8x128xf32, #tpu.memory_space<vmem>>, vector<2x1x128xf32>
    %110 = vector.shape_cast %109 : vector<2x1x128xf32> to vector<2x128xf32>
    %c0_103 = arith.constant 0 : index
    %c3_104 = arith.constant 3 : index
    %c0_105 = arith.constant 0 : index
    %111 = vector.load %arg14[%c0_103, %c3_104, %c0_105] : memref<2x8x128xf32, #tpu.memory_space<vmem>>, vector<2x1x128xf32>
    %112 = vector.shape_cast %111 : vector<2x1x128xf32> to vector<2x128xf32>
    %113 = arith.maximumf %110, %112 : vector<2x128xf32>
    %c1_106 = arith.constant 1 : index
    %c0_107 = arith.constant 0 : index
    %c0_108 = arith.constant 0 : index
    %114 = vector.load %arg6[%c1_106, %c0_107, %c0_108] : memref<4x128x120xf32, #tpu.memory_space<vmem>>, vector<1x128x120xf32>
    %115 = vector.shape_cast %114 : vector<1x128x120xf32> to vector<128x120xf32>
    %cst_109 = arith.constant dense<0.000000e+00> : vector<2x120xf32>
    %116 = tpu.matmul %113, %115, %cst_109 {dimension_numbers = #tpu.dot_dimension_numbers<[1], [0], [0], [1], [0, 0, 1, 1], [], []>} : vector<2x128xf32>, vector<128x120xf32>, vector<2x120xf32> -> vector<2x120xf32>
    %117 = arith.addf %108, %116 : vector<2x120xf32>
    %c0_110 = arith.constant 0 : index
    %c4_111 = arith.constant 4 : index
    %c0_112 = arith.constant 0 : index
    %118 = vector.load %arg14[%c0_110, %c4_111, %c0_112] : memref<2x8x128xf32, #tpu.memory_space<vmem>>, vector<2x1x128xf32>
    %119 = vector.shape_cast %118 : vector<2x1x128xf32> to vector<2x128xf32>
    %c0_113 = arith.constant 0 : index
    %c5_114 = arith.constant 5 : index
    %c0_115 = arith.constant 0 : index
    %120 = vector.load %arg14[%c0_113, %c5_114, %c0_115] : memref<2x8x128xf32, #tpu.memory_space<vmem>>, vector<2x1x128xf32>
    %121 = vector.shape_cast %120 : vector<2x1x128xf32> to vector<2x128xf32>
    %122 = arith.maximumf %119, %121 : vector<2x128xf32>
    %c2_116 = arith.constant 2 : index
    %c0_117 = arith.constant 0 : index
    %c0_118 = arith.constant 0 : index
    %123 = vector.load %arg6[%c2_116, %c0_117, %c0_118] : memref<4x128x120xf32, #tpu.memory_space<vmem>>, vector<1x128x120xf32>
    %124 = vector.shape_cast %123 : vector<1x128x120xf32> to vector<128x120xf32>
    %cst_119 = arith.constant dense<0.000000e+00> : vector<2x120xf32>
    %125 = tpu.matmul %122, %124, %cst_119 {dimension_numbers = #tpu.dot_dimension_numbers<[1], [0], [0], [1], [0, 0, 1, 1], [], []>} : vector<2x128xf32>, vector<128x120xf32>, vector<2x120xf32> -> vector<2x120xf32>
    %126 = arith.addf %117, %125 : vector<2x120xf32>
    %c0_120 = arith.constant 0 : index
    %c6_121 = arith.constant 6 : index
    %c0_122 = arith.constant 0 : index
    %127 = vector.load %arg14[%c0_120, %c6_121, %c0_122] : memref<2x8x128xf32, #tpu.memory_space<vmem>>, vector<2x1x128xf32>
    %128 = vector.shape_cast %127 : vector<2x1x128xf32> to vector<2x128xf32>
    %c0_123 = arith.constant 0 : index
    %c7_124 = arith.constant 7 : index
    %c0_125 = arith.constant 0 : index
    %129 = vector.load %arg14[%c0_123, %c7_124, %c0_125] : memref<2x8x128xf32, #tpu.memory_space<vmem>>, vector<2x1x128xf32>
    %130 = vector.shape_cast %129 : vector<2x1x128xf32> to vector<2x128xf32>
    %131 = arith.maximumf %128, %130 : vector<2x128xf32>
    %c3_126 = arith.constant 3 : index
    %c0_127 = arith.constant 0 : index
    %c0_128 = arith.constant 0 : index
    %132 = vector.load %arg6[%c3_126, %c0_127, %c0_128] : memref<4x128x120xf32, #tpu.memory_space<vmem>>, vector<1x128x120xf32>
    %133 = vector.shape_cast %132 : vector<1x128x120xf32> to vector<128x120xf32>
    %cst_129 = arith.constant dense<0.000000e+00> : vector<2x120xf32>
    %134 = tpu.matmul %131, %133, %cst_129 {dimension_numbers = #tpu.dot_dimension_numbers<[1], [0], [0], [1], [0, 0, 1, 1], [], []>} : vector<2x128xf32>, vector<128x120xf32>, vector<2x120xf32> -> vector<2x120xf32>
    %135 = arith.addf %126, %134 : vector<2x120xf32>
    %136 = arith.negf %135 : vector<2x120xf32>
    %137 = math.exp %136 : vector<2x120xf32>
    %cst_130 = arith.constant 1.000000e+00 : f32
    %138 = vector.broadcast %cst_130 : f32 to vector<2x120xf32>
    %139 = arith.addf %138, %137 : vector<2x120xf32>
    %140 = arith.divf %138, %139 : vector<2x120xf32>
    %c0_131 = arith.constant 0 : index
    %c0_132 = arith.constant 0 : index
    %141 = vector.load %arg8[%c0_131, %c0_132] : memref<120x84xf32, #tpu.memory_space<vmem>>, vector<120x84xf32>
    %cst_133 = arith.constant dense<0.000000e+00> : vector<2x84xf32>
    %142 = tpu.matmul %140, %141, %cst_133 {dimension_numbers = #tpu.dot_dimension_numbers<[1], [0], [0], [1], [0, 0, 1, 1], [], []>} : vector<2x120xf32>, vector<120x84xf32>, vector<2x84xf32> -> vector<2x84xf32>
    %c0_134 = arith.constant 0 : index
    %c0_135 = arith.constant 0 : index
    %143 = vector.load %arg9[%c0_134, %c0_135] : memref<1x84xf32, #tpu.memory_space<vmem>>, vector<1x84xf32>
    %144 = vector.broadcast %143 : vector<1x84xf32> to vector<2x84xf32>
    %145 = arith.addf %142, %144 : vector<2x84xf32>
    %146 = arith.negf %145 : vector<2x84xf32>
    %147 = math.exp %146 : vector<2x84xf32>
    %cst_136 = arith.constant 1.000000e+00 : f32
    %148 = vector.broadcast %cst_136 : f32 to vector<2x84xf32>
    %149 = arith.addf %148, %147 : vector<2x84xf32>
    %150 = arith.divf %148, %149 : vector<2x84xf32>
    %c0_137 = arith.constant 0 : index
    %c0_138 = arith.constant 0 : index
    %151 = vector.load %arg10[%c0_137, %c0_138] : memref<84x128xf32, #tpu.memory_space<vmem>>, vector<84x128xf32>
    %cst_139 = arith.constant dense<0.000000e+00> : vector<2x128xf32>
    %152 = tpu.matmul %150, %151, %cst_139 {dimension_numbers = #tpu.dot_dimension_numbers<[1], [0], [0], [1], [0, 0, 1, 1], [], []>} : vector<2x84xf32>, vector<84x128xf32>, vector<2x128xf32> -> vector<2x128xf32>
    %c0_140 = arith.constant 0 : index
    %c0_141 = arith.constant 0 : index
    %153 = vector.load %arg11[%c0_140, %c0_141] : memref<1x128xf32, #tpu.memory_space<vmem>>, vector<1x128xf32>
    %154 = vector.broadcast %153 : vector<1x128xf32> to vector<2x128xf32>
    %155 = arith.addf %152, %154 : vector<2x128xf32>
    %c0_142 = arith.constant 0 : index
    %c0_143 = arith.constant 0 : index
    %156 = vector.load %arg12[%c0_142, %c0_143] : memref<2x128xf32, #tpu.memory_space<vmem>>, vector<2x128xf32>
    tpu.vector_store %arg12[%c0_142, %c0_143], %155 {strides = array<i32>} : memref<2x128xf32, #tpu.memory_space<vmem>>, vector<2x128xf32>,
    return
  }
  func.func @transform_0(%arg0: i32) -> (i32, i32, i32) {
    %c0_i32 = arith.constant 0 : i32
    %c0_i32_0 = arith.constant 0 : i32
    %c0_i32_1 = arith.constant 0 : i32
    return %arg0, %c0_i32, %c0_i32_0 : i32, i32, i32
  }
  func.func @transform_1(%arg0: i32) -> (i32, i32, i32) {
    %c0_i32 = arith.constant 0 : i32
    %c0_i32_0 = arith.constant 0 : i32
    %c0_i32_1 = arith.constant 0 : i32
    %c0_i32_2 = arith.constant 0 : i32
    return %c0_i32, %c0_i32_0, %c0_i32_1 : i32, i32, i32
  }
  func.func @transform_2(%arg0: i32) -> (i32, i32) {
    %c0_i32 = arith.constant 0 : i32
    %c0_i32_0 = arith.constant 0 : i32
    %c0_i32_1 = arith.constant 0 : i32
    return %c0_i32, %c0_i32_0 : i32, i32
  }
  func.func @transform_3(%arg0: i32) -> (i32, i32, i32) {
    %c0_i32 = arith.constant 0 : i32
    %c0_i32_0 = arith.constant 0 : i32
    %c0_i32_1 = arith.constant 0 : i32
    %c0_i32_2 = arith.constant 0 : i32
    return %c0_i32, %c0_i32_0, %c0_i32_1 : i32, i32, i32
  }
  func.func @transform_4(%arg0: i32) -> (i32, i32) {
    %c0_i32 = arith.constant 0 : i32
    %c0_i32_0 = arith.constant 0 : i32
    %c0_i32_1 = arith.constant 0 : i32
    return %c0_i32, %c0_i32_0 : i32, i32
  }
  func.func @transform_5(%arg0: i32) -> (i32, i32, i32) {
    %c0_i32 = arith.constant 0 : i32
    %c0_i32_0 = arith.constant 0 : i32
    %c0_i32_1 = arith.constant 0 : i32
    %c0_i32_2 = arith.constant 0 : i32
    return %c0_i32, %c0_i32_0, %c0_i32_1 : i32, i32, i32
  }
  func.func @transform_6(%arg0: i32) -> (i32, i32) {
    %c0_i32 = arith.constant 0 : i32
    %c0_i32_0 = arith.constant 0 : i32
    %c0_i32_1 = arith.constant 0 : i32
    return %c0_i32, %c0_i32_0 : i32, i32
  }
  func.func @transform_7(%arg0: i32) -> (i32, i32) {
    %c0_i32 = arith.constant 0 : i32
    %c0_i32_0 = arith.constant 0 : i32
    %c0_i32_1 = arith.constant 0 : i32
    return %c0_i32, %c0_i32_0 : i32, i32
  }
  func.func @transform_8(%arg0: i32) -> (i32, i32) {
    %c0_i32 = arith.constant 0 : i32
    %c0_i32_0 = arith.constant 0 : i32
    %c0_i32_1 = arith.constant 0 : i32
    return %c0_i32, %c0_i32_0 : i32, i32
  }
  func.func @transform_9(%arg0: i32) -> (i32, i32) {
    %c0_i32 = arith.constant 0 : i32
    %c0_i32_0 = arith.constant 0 : i32
    %c0_i32_1 = arith.constant 0 : i32
    return %c0_i32, %c0_i32_0 : i32, i32
  }
  func.func @transform_10(%arg0: i32) -> (i32, i32) {
    %c0_i32 = arith.constant 0 : i32
    %c0_i32_0 = arith.constant 0 : i32
    %c0_i32_1 = arith.constant 0 : i32
    return %c0_i32, %c0_i32_0 : i32, i32
  }
  func.func @transform_11(%arg0: i32) -> (i32, i32) {
    %c0_i32 = arith.constant 0 : i32
    %c0_i32_0 = arith.constant 0 : i32
    return %arg0, %c0_i32 : i32, i32
  }
}

</mosaic_0001>

<llo_original>
// kernel: lenet_pallas_forward.1
$region0: #{lenet_pallas_forward.1}
  #allocation0 [shape = 'u32[]', space=smem, size = 0x4, offset = 0x4, fixed_abs, tag = 'smem constant byte address 0x4 - core index']
  #allocation1 [shape = 'u32[72,128]{1,0:T(1,128)}', space=vmem, size = 0x9000, scoped, tag = 'internal scratch']
  #allocation2 [shape = 'f32[2,24,128]{2,1,0:T(8,128)}', space=vmem, size = 0x6000, scoped, tag = 'scratch operand']
  #allocation3 [shape = 'f32[2,8,128]{2,1,0:T(8,128)}', space=vmem, size = 0x2000, scoped, tag = 'scratch operand']
  %s0 = inlined_call_operand.vmem [shape: f32[2,28,28], index: 0, kind: input, shape index: {}]
  %s1 = inlined_call_operand.vmem [shape: f32[5,28,256], index: 1, kind: input, shape index: {}]
  %s2 = inlined_call_operand.vmem [shape: f32[1,256], index: 2, kind: input, shape index: {}]
  %s3 = inlined_call_operand.hbm [shape: f32[5,128,256], index: 3, kind: input, shape index: {}]
  %s4 = inlined_call_operand.vmem [shape: f32[1,256], index: 4, kind: input, shape index: {}]
  %s5 = inlined_call_operand.vmem [shape: f32[4,128,120], index: 5, kind: input, shape index: {}]
  %s6 = inlined_call_operand.vmem [shape: f32[1,120], index: 6, kind: input, shape index: {}]
  %s7 = inlined_call_operand.vmem [shape: f32[120,84], index: 7, kind: input, shape index: {}]
  %s8 = inlined_call_operand.vmem [shape: f32[1,84], index: 8, kind: input, shape index: {}]
  %s9 = inlined_call_operand.vmem [shape: f32[84,128], index: 9, kind: input, shape index: {}]
  %s10 = inlined_call_operand.vmem [shape: f32[1,128], index: 10, kind: input, shape index: {}]
  %s11 = inlined_call_operand.hbm [shape: f32[2,128], index: 11, kind: output, shape index: {}]
  %s12 = sld [smem:[#allocation0]]
  $region58: #{lenet_pallas_forward.1} parent=0
    _
  %s14 = ssub.s32 1, %s12
  %s15 = scalar_select 0, %s14, %s12
  $region1: #{lenet_pallas_forward.1} parent=0
    #allocation4 [shape = 'u8[655360]{0}', space=vmem, size = 0xa0000, scoped, tag = 'input window, operand 3, single buffered']
    #allocation5 [shape = 's32[1]{0}', space=sflag, size = 0x4, scoped, tag = 'scoped memory for lenet_pallas_forward.1']
    #allocation6 [shape = 's32[1]{0}', space=sflag, size = 0x4, scoped, tag = 'scoped memory for lenet_pallas_forward.1']
    #allocation7 [shape = 'u8[1024]{0}', space=vmem, size = 0x400, scoped, tag = 'output window, operand 0, single buffered']
    %16 = vsyncpa [#allocation5], 0
    %17 = vsyncpa [#allocation6], 0
    // Predicated region
    $region2: #{lenet_pallas_forward.1} parent=1 // pred_check
      _
    $region3: #{lenet_pallas_forward.1} parent=1 // pred_check_branch
      %19 = sbr.rel (0) target = $region5
    $region4: #{lenet_pallas_forward.1} parent=1 // pred_region
      _
    $region5: #{lenet_pallas_forward.1} parent=1 // pred_fallthru
      _
    // Predicated region
    $region6: #{lenet_pallas_forward.1} parent=1 // pred_check
      _
    $region7: #{lenet_pallas_forward.1} parent=1 // pred_check_branch
      %21 = sbr.rel (0) target = $region9
    $region8: #{lenet_pallas_forward.1} parent=1 // pred_region
      _
    $region9: #{lenet_pallas_forward.1} parent=1 // pred_fallthru
      _
    // Predicated region
    $region10: #{lenet_pallas_forward.1} parent=1 // pred_check
      _
    $region11: #{lenet_pallas_forward.1} parent=1 // pred_check_branch
      %23 = sbr.rel (0) target = $region13
    $region12: #{lenet_pallas_forward.1} parent=1 // pred_region
      _
    $region13: #{lenet_pallas_forward.1} parent=1 // pred_fallthru
      _
    // Predicated region
    $region14: #{lenet_pallas_forward.1} parent=1 // pred_check
      _
    $region15: #{lenet_pallas_forward.1} parent=1 // pred_check_branch
      %25 = sbr.rel (0) target = $region17
    $region16: #{lenet_pallas_forward.1} parent=1 // pred_region
      %27 = vsyncadd [#allocation5], 0
      %s28 = sshll.u32 %s3, 4
      %s29 = int_to_ptr.hbm [resolvable:$true] %s28
      %s30 = sshll.u32 [#allocation4], 4
      %s31 = int_to_ptr.vmem [resolvable:$true] %s30
      %36 = dma.hbm_to_vmem [thread:$0]  %s29, 20480, %s31, [#allocation5], 256, 256, 16
    $region17: #{lenet_pallas_forward.1} parent=1 // pred_fallthru
      _
    // Predicated region
    $region18: #{lenet_pallas_forward.1} parent=1 // pred_check
      _
    $region19: #{lenet_pallas_forward.1} parent=1 // pred_check_branch
      %38 = sbr.rel (0) target = $region21
    $region20: #{lenet_pallas_forward.1} parent=1 // pred_region
      _
    $region21: #{lenet_pallas_forward.1} parent=1 // pred_fallthru
      _
    // Predicated region
    $region22: #{lenet_pallas_forward.1} parent=1 // pred_check
      _
    $region23: #{lenet_pallas_forward.1} parent=1 // pred_check_branch
      %40 = sbr.rel (0) target = $region25
    $region24: #{lenet_pallas_forward.1} parent=1 // pred_region
      _
    $region25: #{lenet_pallas_forward.1} parent=1 // pred_fallthru
      _
    // Predicated region
    $region26: #{lenet_pallas_forward.1} parent=1 // pred_check
      _
    $region27: #{lenet_pallas_forward.1} parent=1 // pred_check_branch
      %42 = sbr.rel (0) target = $region29
    $region28: #{lenet_pallas_forward.1} parent=1 // pred_region
      _
    $region29: #{lenet_pallas_forward.1} parent=1 // pred_fallthru
      _
    // Predicated region
    $region30: #{lenet_pallas_forward.1} parent=1 // pred_check
      _
    $region31: #{lenet_pallas_forward.1} parent=1 // pred_check_branch
      %44 = sbr.rel (0) target = $region33
    $region32: #{lenet_pallas_forward.1} parent=1 // pred_region
      _
    $region33: #{lenet_pallas_forward.1} parent=1 // pred_fallthru
      _
    // Predicated region
    $region34: #{lenet_pallas_forward.1} parent=1 // pred_check
      _
    $region35: #{lenet_pallas_forward.1} parent=1 // pred_check_branch
      %46 = sbr.rel (0) target = $region37
    $region36: #{lenet_pallas_forward.1} parent=1 // pred_region
      _
    $region37: #{lenet_pallas_forward.1} parent=1 // pred_fallthru
      _
    // Predicated region
    $region38: #{lenet_pallas_forward.1} parent=1 // pred_check
      _
    $region39: #{lenet_pallas_forward.1} parent=1 // pred_check_branch
      %48 = sbr.rel (0) target = $region41
    $region40: #{lenet_pallas_forward.1} parent=1 // pred_region
      _
    $region41: #{lenet_pallas_forward.1} parent=1 // pred_fallthru
      _
    // Predicated region
    $region42: #{lenet_pallas_forward.1} parent=1 // pred_check
      _
    $region43: #{lenet_pallas_forward.1} parent=1 // pred_check_branch
      %50 = sbr.rel (0) target = $region45
    $region44: #{lenet_pallas_forward.1} parent=1 // pred_region
      _
    $region45: #{lenet_pallas_forward.1} parent=1 // pred_fallthru
      _
    // Predicated region
    $region46: #{lenet_pallas_forward.1} parent=1 // pred_check
      _
    $region47: #{lenet_pallas_forward.1} parent=1 // pred_check_branch
      %52 = sbr.rel (0) target = $region49
    $region48: #{lenet_pallas_forward.1} parent=1 // pred_region
      %54 = dma.done [#allocation5], 20480
    $region49: #{lenet_pallas_forward.1} parent=1 // pred_fallthru
      _
    %v55 = vld [vmem:[%s0] sm:$0xff]
    %v56 = vld [vmem:[%s0 + $0x8] sm:$0xff]
    %v57 = vld [vmem:[%s0 + $0x10] sm:$0xff]
    %v58 = vld [vmem:[%s0 + $0x20] sm:$0xff]
    %v59 = vld [vmem:[%s0 + $0x28] sm:$0xff]
    %v60 = vld [vmem:[%s0 + $0x30] sm:$0xff]
    %v61 = vld [vmem:[%s1] sm:$0xff]
    %v62 = vld [vmem:[%s1 + $0x8] sm:$0xff]
    %v63 = vld [vmem:[%s1 + $0x10] sm:$0xff]
    %v64 = vld [vmem:[%s1 + $0x18] sm:$0xff]
    %v65 = vld [vmem:[%s1 + $0x20] sm:$0xff]
    %v66 = vld [vmem:[%s1 + $0x28] sm:$0xff]
    %v67 = vld [vmem:[%s1 + $0x30] sm:$0xf]
    %v68 = vld [vmem:[%s1 + $0x38] sm:$0xf]
    %v69 = vld [vmem:[%s0 + $0x1] sm:$0xff]
    %v70 = vld [vmem:[%s0 + $0x9] sm:$0xff]
    %v71 = vld [vmem:[%s0 + $0x11] sm:$0xff]
    %v72 = vld [vmem:[%s0 + $0x21] sm:$0xff]
    %v73 = vld [vmem:[%s0 + $0x29] sm:$0xff]
    %v74 = vld [vmem:[%s0 + $0x31] sm:$0xff]
    %s75 = scalar_lea.vmem %s1, 64
    %v76 = vld [vmem:[%s75] sm:$0xff]
    %v77 = vld [vmem:[%s75 + $0x8] sm:$0xff]
    %v78 = vld [vmem:[%s75 + $0x10] sm:$0xff]
    %v79 = vld [vmem:[%s75 + $0x18] sm:$0xff]
    %v80 = vld [vmem:[%s75 + $0x20] sm:$0xff]
    %v81 = vld [vmem:[%s75 + $0x28] sm:$0xff]
    %v82 = vld [vmem:[%s75 + $0x30] sm:$0xf]
    %v83 = vld [vmem:[%s75 + $0x38] sm:$0xf]
    %vm84 = vcmask 228352
    %v86 = vsel %vm84, %v69, 0
    %v89 = vsel %vm84, %v70, 0
    %v92 = vsel %vm84, %v71, 0
    %v95 = vsel %vm84, %v72, 0
    %v98 = vsel %vm84, %v73, 0
    %v101 = vsel %vm84, %v74, 0
    %vm103 = vcmask 1043456
    %v105 = vsel %vm103, %v82, 0
    %v108 = vsel %vm103, %v83, 0
    %110 = vmatpush.msra.mxu0 0.0
    %111 = vmatpush.msra.mxu0 0.0
    %112 = vmatpush.msra.mxu0 0.0
    %113 = vmatpush.msra.mxu0 0.0
    %114 = vmatpush.msra.mxu0 0.0
    %115 = vmatpush.msra.mxu0 0.0
    %116 = vmatpush.msra.mxu0 0.0
    %117 = vmatpush.msra.mxu0 0.0
    %118 = vmatpush.msra.mxu0 0.0
    %119 = vmatpush.msra.mxu0 0.0
    %120 = vmatpush.msra.mxu0 0.0
    %121 = vmatpush.msra.mxu0 0.0
    %122 = vmatpush.msra.mxu0 %v105
    %123 = vmatpush.msra.mxu0 %v80
    %124 = vmatpush.msra.mxu0 %v78
    %125 = vmatpush.msra.mxu0 %v76
    %126 = vmatmul.f32.gmra.mxu0 %v86
    %v127 = vpop.f32.mrf.mxu0
    %v128 = vadd.f32 0.0, %v127
    %129 = vmatmul.f32.gmra.mxu0 %v89
    %v130 = vpop.f32.mrf.mxu0
    %v131 = vadd.f32 0.0, %v130
    %132 = vmatmul.f32.gmra.mxu0 %v92
    %v133 = vpop.f32.mrf.mxu0
    %v134 = vadd.f32 0.0, %v133
    %135 = vmatmul.f32.gmra.mxu0 %v95
    %v136 = vpop.f32.mrf.mxu0
    %v137 = vadd.f32 0.0, %v136
    %138 = vmatmul.f32.gmra.mxu0 %v98
    %v139 = vpop.f32.mrf.mxu0
    %v140 = vadd.f32 0.0, %v139
    %141 = vmatmul.f32.gmra.mxu0 %v101
    %v142 = vpop.f32.mrf.mxu0
    %v143 = vadd.f32 0.0, %v142
    %144 = vdwg.mxu0
    %145 = vmatpush.msra.mxu0 0.0
    %146 = vmatpush.msra.mxu0 0.0
    %147 = vmatpush.msra.mxu0 0.0
    %148 = vmatpush.msra.mxu0 0.0
    %149 = vmatpush.msra.mxu0 0.0
    %150 = vmatpush.msra.mxu0 0.0
    %151 = vmatpush.msra.mxu0 0.0
    %152 = vmatpush.msra.mxu0 0.0
    %153 = vmatpush.msra.mxu0 0.0
    %154 = vmatpush.msra.mxu0 0.0
    %155 = vmatpush.msra.mxu0 0.0
    %156 = vmatpush.msra.mxu0 0.0
    %157 = vmatpush.msra.mxu0 %v108
    %158 = vmatpush.msra.mxu0 %v81
    %159 = vmatpush.msra.mxu0 %v79
    %160 = vmatpush.msra.mxu0 %v77
    %161 = vmatmul.f32.gmra.mxu0 %v86
    %v162 = vpop.f32.mrf.mxu0
    %v163 = vadd.f32 0.0, %v162
    %164 = vmatmul.f32.gmra.mxu0 %v89
    %v165 = vpop.f32.mrf.mxu0
    %v166 = vadd.f32 0.0, %v165
    %167 = vmatmul.f32.gmra.mxu0 %v92
    %v168 = vpop.f32.mrf.mxu0
    %v169 = vadd.f32 0.0, %v168
    %170 = vmatmul.f32.gmra.mxu0 %v95
    %v171 = vpop.f32.mrf.mxu0
    %v172 = vadd.f32 0.0, %v171
    %173 = vmatmul.f32.gmra.mxu0 %v98
    %v174 = vpop.f32.mrf.mxu0
    %v175 = vadd.f32 0.0, %v174
    %176 = vmatmul.f32.gmra.mxu0 %v101
    %v177 = vpop.f32.mrf.mxu0
    %v178 = vadd.f32 0.0, %v177
    %179 = vdwg.mxu0
    %v181 = vsel %vm84, %v55, 0
    %v184 = vsel %vm84, %v56, 0
    %v187 = vsel %vm84, %v57, 0
    %v190 = vsel %vm84, %v58, 0
    %v193 = vsel %vm84, %v59, 0
    %v196 = vsel %vm84, %v60, 0
    %v199 = vsel %vm103, %v67, 0
    %v202 = vsel %vm103, %v68, 0
    %204 = vmatpush.msra.mxu0 0.0
    %205 = vmatpush.msra.mxu0 0.0
    %206 = vmatpush.msra.mxu0 0.0
    %207 = vmatpush.msra.mxu0 0.0
    %208 = vmatpush.msra.mxu0 0.0
    %209 = vmatpush.msra.mxu0 0.0
    %210 = vmatpush.msra.mxu0 0.0
    %211 = vmatpush.msra.mxu0 0.0
    %212 = vmatpush.msra.mxu0 0.0
    %213 = vmatpush.msra.mxu0 0.0
    %214 = vmatpush.msra.mxu0 0.0
    %215 = vmatpush.msra.mxu0 0.0
    %216 = vmatpush.msra.mxu0 %v199
    %217 = vmatpush.msra.mxu0 %v65
    %218 = vmatpush.msra.mxu0 %v63
    %219 = vmatpush.msra.mxu0 %v61
    %220 = vmatmul.f32.gmra.mxu0 %v181
    %v221 = vpop.f32.mrf.mxu0
    %v222 = vadd.f32 %v128, %v221
    %223 = vmatmul.f32.gmra.mxu0 %v184
    %v224 = vpop.f32.mrf.mxu0
    %v225 = vadd.f32 %v131, %v224
    %226 = vmatmul.f32.gmra.mxu0 %v187
    %v227 = vpop.f32.mrf.mxu0
    %v228 = vadd.f32 %v134, %v227
    %229 = vmatmul.f32.gmra.mxu0 %v190
    %v230 = vpop.f32.mrf.mxu0
    %v231 = vadd.f32 %v137, %v230
    %232 = vmatmul.f32.gmra.mxu0 %v193
    %v233 = vpop.f32.mrf.mxu0
    %v234 = vadd.f32 %v140, %v233
    %235 = vmatmul.f32.gmra.mxu0 %v196
    %v236 = vpop.f32.mrf.mxu0
    %v237 = vadd.f32 %v143, %v236
    %238 = vdwg.mxu0
    %239 = vmatpush.msra.mxu0 0.0
    %240 = vmatpush.msra.mxu0 0.0
    %241 = vmatpush.msra.mxu0 0.0
    %242 = vmatpush.msra.mxu0 0.0
    %243 = vmatpush.msra.mxu0 0.0
    %244 = vmatpush.msra.mxu0 0.0
    %245 = vmatpush.msra.mxu0 0.0
    %246 = vmatpush.msra.mxu0 0.0
    %247 = vmatpush.msra.mxu0 0.0
    %248 = vmatpush.msra.mxu0 0.0
    %249 = vmatpush.msra.mxu0 0.0
    %250 = vmatpush.msra.mxu0 0.0
    %251 = vmatpush.msra.mxu0 %v202
    %252 = vmatpush.msra.mxu0 %v66
    %253 = vmatpush.msra.mxu0 %v64
    %254 = vmatpush.msra.mxu0 %v62
    %255 = vmatmul.f32.gmra.mxu0 %v181
    %v256 = vpop.f32.mrf.mxu0
    %v257 = vadd.f32 %v163, %v256
    %258 = vmatmul.f32.gmra.mxu0 %v184
    %v259 = vpop.f32.mrf.mxu0
    %v260 = vadd.f32 %v166, %v259
    %261 = vmatmul.f32.gmra.mxu0 %v187
    %v262 = vpop.f32.mrf.mxu0
    %v263 = vadd.f32 %v169, %v262
    %264 = vmatmul.f32.gmra.mxu0 %v190
    %v265 = vpop.f32.mrf.mxu0
    %v266 = vadd.f32 %v172, %v265
    %267 = vmatmul.f32.gmra.mxu0 %v193
    %v268 = vpop.f32.mrf.mxu0
    %v269 = vadd.f32 %v175, %v268
    %270 = vmatmul.f32.gmra.mxu0 %v196
    %v271 = vpop.f32.mrf.mxu0
    %v272 = vadd.f32 %v178, %v271
    %273 = vdwg.mxu0
    %v274 = vld [vmem:[%s0 + $0x2] sm:$0xff]
    %v275 = vld [vmem:[%s0 + $0xa] sm:$0xff]
    %v276 = vld [vmem:[%s0 + $0x12] sm:$0xff]
    %v277 = vld [vmem:[%s0 + $0x22] sm:$0xff]
    %v278 = vld [vmem:[%s0 + $0x2a] sm:$0xff]
    %v279 = vld [vmem:[%s0 + $0x32] sm:$0xff]
    %s280 = scalar_lea.vmem %s1, 128
    %v281 = vld [vmem:[%s280] sm:$0xff]
    %v282 = vld [vmem:[%s280 + $0x8] sm:$0xff]
    %v283 = vld [vmem:[%s280 + $0x10] sm:$0xff]
    %v284 = vld [vmem:[%s280 + $0x18] sm:$0xff]
    %v285 = vld [vmem:[%s280 + $0x20] sm:$0xff]
    %v286 = vld [vmem:[%s280 + $0x28] sm:$0xff]
    %v287 = vld [vmem:[%s280 + $0x30] sm:$0xf]
    %v288 = vld [vmem:[%s280 + $0x38] sm:$0xf]
    %v290 = vsel %vm84, %v274, 0
    %v293 = vsel %vm84, %v275, 0
    %v296 = vsel %vm84, %v276, 0
    %v299 = vsel %vm84, %v277, 0
    %v302 = vsel %vm84, %v278, 0
    %v305 = vsel %vm84, %v279, 0
    %v308 = vsel %vm103, %v287, 0
    %v311 = vsel %vm103, %v288, 0
    %313 = vmatpush.msra.mxu0 0.0
    %314 = vmatpush.msra.mxu0 0.0
    %315 = vmatpush.msra.mxu0 0.0
    %316 = vmatpush.msra.mxu0 0.0
    %317 = vmatpush.msra.mxu0 0.0
    %318 = vmatpush.msra.mxu0 0.0
    %319 = vmatpush.msra.mxu0 0.0
    %320 = vmatpush.msra.mxu0 0.0
    %321 = vmatpush.msra.mxu0 0.0
    %322 = vmatpush.msra.mxu0 0.0
    %323 = vmatpush.msra.mxu0 0.0
    %324 = vmatpush.msra.mxu0 0.0
    %325 = vmatpush.msra.mxu0 %v308
    %326 = vmatpush.msra.mxu0 %v285
    %327 = vmatpush.msra.mxu0 %v283
    %328 = vmatpush.msra.mxu0 %v281
    %329 = vmatmul.f32.gmra.mxu0 %v290
    %v330 = vpop.f32.mrf.mxu0
    %v331 = vadd.f32 0.0, %v330
    %332 = vmatmul.f32.gmra.mxu0 %v293
    %v333 = vpop.f32.mrf.mxu0
    %v334 = vadd.f32 0.0, %v333
    %335 = vmatmul.f32.gmra.mxu0 %v296
    %v336 = vpop.f32.mrf.mxu0
    %v337 = vadd.f32 0.0, %v336
    %338 = vmatmul.f32.gmra.mxu0 %v299
    %v339 = vpop.f32.mrf.mxu0
    %v340 = vadd.f32 0.0, %v339
    %341 = vmatmul.f32.gmra.mxu0 %v302
    %v342 = vpop.f32.mrf.mxu0
    %v343 = vadd.f32 0.0, %v342
    %344 = vmatmul.f32.gmra.mxu0 %v305
    %v345 = vpop.f32.mrf.mxu0
    %v346 = vadd.f32 0.0, %v345
    %347 = vdwg.mxu0
    %348 = vmatpush.msra.mxu0 0.0
    %349 = vmatpush.msra.mxu0 0.0
    %350 = vmatpush.msra.mxu0 0.0
    %351 = vmatpush.msra.mxu0 0.0
    %352 = vmatpush.msra.mxu0 0.0
    %353 = vmatpush.msra.mxu0 0.0
    %354 = vmatpush.msra.mxu0 0.0
    %355 = vmatpush.msra.mxu0 0.0
    %356 = vmatpush.msra.mxu0 0.0
    %357 = vmatpush.msra.mxu0 0.0
    %358 = vmatpush.msra.mxu0 0.0
    %359 = vmatpush.msra.mxu0 0.0
    %360 = vmatpush.msra.mxu0 %v311
    %361 = vmatpush.msra.mxu0 %v286
    %362 = vmatpush.msra.mxu0 %v284
    %363 = vmatpush.msra.mxu0 %v282
    %364 = vmatmul.f32.gmra.mxu0 %v290
    %v365 = vpop.f32.mrf.mxu0
    %v366 = vadd.f32 0.0, %v365
    %367 = vmatmul.f32.gmra.mxu0 %v293
    %v368 = vpop.f32.mrf.mxu0
    %v369 = vadd.f32 0.0, %v368
    %370 = vmatmul.f32.gmra.mxu0 %v296
    %v371 = vpop.f32.mrf.mxu0
    %v372 = vadd.f32 0.0, %v371
    %373 = vmatmul.f32.gmra.mxu0 %v299
    %v374 = vpop.f32.mrf.mxu0
    %v375 = vadd.f32 0.0, %v374
    %376 = vmatmul.f32.gmra.mxu0 %v302
    %v377 = vpop.f32.mrf.mxu0
    %v378 = vadd.f32 0.0, %v377
    %379 = vmatmul.f32.gmra.mxu0 %v305
    %v380 = vpop.f32.mrf.mxu0
    %v381 = vadd.f32 0.0, %v380
    %382 = vdwg.mxu0
    %v383 = vadd.f32 %v222, %v331
    %v384 = vadd.f32 %v257, %v366
    %v385 = vadd.f32 %v225, %v334
    %v386 = vadd.f32 %v260, %v369
    %v387 = vadd.f32 %v228, %v337
    %v388 = vadd.f32 %v263, %v372
    %v389 = vadd.f32 %v231, %v340
    %v390 = vadd.f32 %v266, %v375
    %v391 = vadd.f32 %v234, %v343
    %v392 = vadd.f32 %v269, %v378
    %v393 = vadd.f32 %v237, %v346
    %v394 = vadd.f32 %v272, %v381
    %v395 = vld [vmem:[%s0 + $0x3] sm:$0xff]
    %v396 = vld [vmem:[%s0 + $0xb] sm:$0xff]
    %v397 = vld [vmem:[%s0 + $0x13] sm:$0xff]
    %v398 = vld [vmem:[%s0 + $0x23] sm:$0xff]
    %v399 = vld [vmem:[%s0 + $0x2b] sm:$0xff]
    %v400 = vld [vmem:[%s0 + $0x33] sm:$0xff]
    %s401 = scalar_lea.vmem %s1, 192
    %v402 = vld [vmem:[%s401] sm:$0xff]
    %v403 = vld [vmem:[%s401 + $0x8] sm:$0xff]
    %v404 = vld [vmem:[%s401 + $0x10] sm:$0xff]
    %v405 = vld [vmem:[%s401 + $0x18] sm:$0xff]
    %v406 = vld [vmem:[%s401 + $0x20] sm:$0xff]
    %v407 = vld [vmem:[%s401 + $0x28] sm:$0xff]
    %v408 = vld [vmem:[%s401 + $0x30] sm:$0xf]
    %v409 = vld [vmem:[%s401 + $0x38] sm:$0xf]
    %v411 = vsel %vm84, %v395, 0
    %v414 = vsel %vm84, %v396, 0
    %v417 = vsel %vm84, %v397, 0
    %v420 = vsel %vm84, %v398, 0
    %v423 = vsel %vm84, %v399, 0
    %v426 = vsel %vm84, %v400, 0
    %v429 = vsel %vm103, %v408, 0
    %v432 = vsel %vm103, %v409, 0
    %434 = vmatpush.msra.mxu0 0.0
    %435 = vmatpush.msra.mxu0 0.0
    %436 = vmatpush.msra.mxu0 0.0
    %437 = vmatpush.msra.mxu0 0.0
    %438 = vmatpush.msra.mxu0 0.0
    %439 = vmatpush.msra.mxu0 0.0
    %440 = vmatpush.msra.mxu0 0.0
    %441 = vmatpush.msra.mxu0 0.0
    %442 = vmatpush.msra.mxu0 0.0
    %443 = vmatpush.msra.mxu0 0.0
    %444 = vmatpush.msra.mxu0 0.0
    %445 = vmatpush.msra.mxu0 0.0
    %446 = vmatpush.msra.mxu0 %v429
    %447 = vmatpush.msra.mxu0 %v406
    %448 = vmatpush.msra.mxu0 %v404
    %449 = vmatpush.msra.mxu0 %v402
    %450 = vmatmul.f32.gmra.mxu0 %v411
    %v451 = vpop.f32.mrf.mxu0
    %v452 = vadd.f32 0.0, %v451
    %453 = vmatmul.f32.gmra.mxu0 %v414
    %v454 = vpop.f32.mrf.mxu0
    %v455 = vadd.f32 0.0, %v454
    %456 = vmatmul.f32.gmra.mxu0 %v417
    %v457 = vpop.f32.mrf.mxu0
    %v458 = vadd.f32 0.0, %v457
    %459 = vmatmul.f32.gmra.mxu0 %v420
    %v460 = vpop.f32.mrf.mxu0
    %v461 = vadd.f32 0.0, %v460
    %462 = vmatmul.f32.gmra.mxu0 %v423
    %v463 = vpop.f32.mrf.mxu0
    %v464 = vadd.f32 0.0, %v463
    %465 = vmatmul.f32.gmra.mxu0 %v426
    %v466 = vpop.f32.mrf.mxu0
    %v467 = vadd.f32 0.0, %v466
    %468 = vdwg.mxu0
    %469 = vmatpush.msra.mxu0 0.0
    %470 = vmatpush.msra.mxu0 0.0
    %471 = vmatpush.msra.mxu0 0.0
    %472 = vmatpush.msra.mxu0 0.0
    %473 = vmatpush.msra.mxu0 0.0
    %474 = vmatpush.msra.mxu0 0.0
    %475 = vmatpush.msra.mxu0 0.0
    %476 = vmatpush.msra.mxu0 0.0
    %477 = vmatpush.msra.mxu0 0.0
    %478 = vmatpush.msra.mxu0 0.0
    %479 = vmatpush.msra.mxu0 0.0
    %480 = vmatpush.msra.mxu0 0.0
    %481 = vmatpush.msra.mxu0 %v432
    %482 = vmatpush.msra.mxu0 %v407
    %483 = vmatpush.msra.mxu0 %v405
    %484 = vmatpush.msra.mxu0 %v403
    %485 = vmatmul.f32.gmra.mxu0 %v411
    %v486 = vpop.f32.mrf.mxu0
    %v487 = vadd.f32 0.0, %v486
    %488 = vmatmul.f32.gmra.mxu0 %v414
    %v489 = vpop.f32.mrf.mxu0
    %v490 = vadd.f32 0.0, %v489
    %491 = vmatmul.f32.gmra.mxu0 %v417
    %v492 = vpop.f32.mrf.mxu0
    %v493 = vadd.f32 0.0, %v492
    %494 = vmatmul.f32.gmra.mxu0 %v420
    %v495 = vpop.f32.mrf.mxu0
    %v496 = vadd.f32 0.0, %v495
    %497 = vmatmul.f32.gmra.mxu0 %v423
    %v498 = vpop.f32.mrf.mxu0
    %v499 = vadd.f32 0.0, %v498
    %500 = vmatmul.f32.gmra.mxu0 %v426
    %v501 = vpop.f32.mrf.mxu0
    %v502 = vadd.f32 0.0, %v501
    %503 = vdwg.mxu0
    %v504 = vadd.f32 %v383, %v452
    %v505 = vadd.f32 %v384, %v487
    %v506 = vadd.f32 %v385, %v455
    %v507 = vadd.f32 %v386, %v490
    %v508 = vadd.f32 %v387, %v458
    %v509 = vadd.f32 %v388, %v493
    %v510 = vadd.f32 %v389, %v461
    %v511 = vadd.f32 %v390, %v496
    %v512 = vadd.f32 %v391, %v464
    %v513 = vadd.f32 %v392, %v499
    %v514 = vadd.f32 %v393, %v467
    %v515 = vadd.f32 %v394, %v502
    %v516 = vld [vmem:[%s0 + $0x4] sm:$0xff]
    %v517 = vld [vmem:[%s0 + $0xc] sm:$0xff]
    %v518 = vld [vmem:[%s0 + $0x14] sm:$0xff]
    %v519 = vld [vmem:[%s0 + $0x24] sm:$0xff]
    %v520 = vld [vmem:[%s0 + $0x2c] sm:$0xff]
    %v521 = vld [vmem:[%s0 + $0x34] sm:$0xff]
    %s522 = scalar_lea.vmem %s1, 256
    %v523 = vld [vmem:[%s522] sm:$0xff]
    %v524 = vld [vmem:[%s522 + $0x8] sm:$0xff]
    %v525 = vld [vmem:[%s522 + $0x10] sm:$0xff]
    %v526 = vld [vmem:[%s522 + $0x18] sm:$0xff]
    %v527 = vld [vmem:[%s522 + $0x20] sm:$0xff]
    %v528 = vld [vmem:[%s522 + $0x28] sm:$0xff]
    %v529 = vld [vmem:[%s522 + $0x30] sm:$0xf]
    %v530 = vld [vmem:[%s522 + $0x38] sm:$0xf]
    %v532 = vsel %vm84, %v516, 0
    %v535 = vsel %vm84, %v517, 0
    %v538 = vsel %vm84, %v518, 0
    %v541 = vsel %vm84, %v519, 0
    %v544 = vsel %vm84, %v520, 0
    %v547 = vsel %vm84, %v521, 0
    %v550 = vsel %vm103, %v529, 0
    %v553 = vsel %vm103, %v530, 0
    %555 = vmatpush.msra.mxu0 0.0
    %556 = vmatpush.msra.mxu0 0.0
    %557 = vmatpush.msra.mxu0 0.0
    %558 = vmatpush.msra.mxu0 0.0
    %559 = vmatpush.msra.mxu0 0.0
    %560 = vmatpush.msra.mxu0 0.0
    %561 = vmatpush.msra.mxu0 0.0
    %562 = vmatpush.msra.mxu0 0.0
    %563 = vmatpush.msra.mxu0 0.0
    %564 = vmatpush.msra.mxu0 0.0
    %565 = vmatpush.msra.mxu0 0.0
    %566 = vmatpush.msra.mxu0 0.0
    %567 = vmatpush.msra.mxu0 %v550
    %568 = vmatpush.msra.mxu0 %v527
    %569 = vmatpush.msra.mxu0 %v525
    %570 = vmatpush.msra.mxu0 %v523
    %571 = vmatmul.f32.gmra.mxu0 %v532
    %v572 = vpop.f32.mrf.mxu0
    %v573 = vadd.f32 0.0, %v572
    %574 = vmatmul.f32.gmra.mxu0 %v535
    %v575 = vpop.f32.mrf.mxu0
    %v576 = vadd.f32 0.0, %v575
    %577 = vmatmul.f32.gmra.mxu0 %v538
    %v578 = vpop.f32.mrf.mxu0
    %v579 = vadd.f32 0.0, %v578
    %580 = vmatmul.f32.gmra.mxu0 %v541
    %v581 = vpop.f32.mrf.mxu0
    %v582 = vadd.f32 0.0, %v581
    %583 = vmatmul.f32.gmra.mxu0 %v544
    %v584 = vpop.f32.mrf.mxu0
    %v585 = vadd.f32 0.0, %v584
    %586 = vmatmul.f32.gmra.mxu0 %v547
    %v587 = vpop.f32.mrf.mxu0
    %v588 = vadd.f32 0.0, %v587
    %589 = vdwg.mxu0
    %590 = vmatpush.msra.mxu0 0.0
    %591 = vmatpush.msra.mxu0 0.0
    %592 = vmatpush.msra.mxu0 0.0
    %593 = vmatpush.msra.mxu0 0.0
    %594 = vmatpush.msra.mxu0 0.0
    %595 = vmatpush.msra.mxu0 0.0
    %596 = vmatpush.msra.mxu0 0.0
    %597 = vmatpush.msra.mxu0 0.0
    %598 = vmatpush.msra.mxu0 0.0
    %599 = vmatpush.msra.mxu0 0.0
    %600 = vmatpush.msra.mxu0 0.0
    %601 = vmatpush.msra.mxu0 0.0
    %602 = vmatpush.msra.mxu0 %v553
    %603 = vmatpush.msra.mxu0 %v528
    %604 = vmatpush.msra.mxu0 %v526
    %605 = vmatpush.msra.mxu0 %v524
    %606 = vmatmul.f32.gmra.mxu0 %v532
    %v607 = vpop.f32.mrf.mxu0
    %v608 = vadd.f32 0.0, %v607
    %609 = vmatmul.f32.gmra.mxu0 %v535
    %v610 = vpop.f32.mrf.mxu0
    %v611 = vadd.f32 0.0, %v610
    %612 = vmatmul.f32.gmra.mxu0 %v538
    %v613 = vpop.f32.mrf.mxu0
    %v614 = vadd.f32 0.0, %v613
    %615 = vmatmul.f32.gmra.mxu0 %v541
    %v616 = vpop.f32.mrf.mxu0
    %v617 = vadd.f32 0.0, %v616
    %618 = vmatmul.f32.gmra.mxu0 %v544
    %v619 = vpop.f32.mrf.mxu0
    %v620 = vadd.f32 0.0, %v619
    %621 = vmatmul.f32.gmra.mxu0 %v547
    %v622 = vpop.f32.mrf.mxu0
    %v623 = vadd.f32 0.0, %v622
    %624 = vdwg.mxu0
    %v625 = vadd.f32 %v504, %v573
    %v626 = vadd.f32 %v505, %v608
    %v627 = vadd.f32 %v506, %v576
    %v628 = vadd.f32 %v507, %v611
    %v629 = vadd.f32 %v508, %v579
    %v630 = vadd.f32 %v509, %v614
    %v631 = vadd.f32 %v510, %v582
    %v632 = vadd.f32 %v511, %v617
    %v633 = vadd.f32 %v512, %v585
    %v634 = vadd.f32 %v513, %v620
    %v635 = vadd.f32 %v514, %v588
    %v636 = vadd.f32 %v515, %v623
    %v637 = vld [vmem:[%s2] sm:$0x3]
    %v639 = vperm.slane %v637, 0
    %v640 = vperm.slane %v637, 1
    %v643 = vadd.f32 %v625, %v639
    %v644 = vadd.f32 %v626, %v640
    %v645 = vadd.f32 %v627, %v639
    %v646 = vadd.f32 %v628, %v640
    %v647 = vadd.f32 %v629, %v639
    %v648 = vadd.f32 %v630, %v640
    %v649 = vadd.f32 %v631, %v639
    %v650 = vadd.f32 %v632, %v640
    %v651 = vadd.f32 %v633, %v639
    %v652 = vadd.f32 %v634, %v640
    %v653 = vadd.f32 %v635, %v639
    %v654 = vadd.f32 %v636, %v640
    %v655 = vxor.u32 %v643, 2147483648
    %v656 = vxor.u32 %v644, 2147483648
    %v657 = vxor.u32 %v645, 2147483648
    %v658 = vxor.u32 %v646, 2147483648
    %v659 = vxor.u32 %v647, 2147483648
    %v660 = vxor.u32 %v648, 2147483648
    %v661 = vxor.u32 %v649, 2147483648
    %v662 = vxor.u32 %v650, 2147483648
    %v663 = vxor.u32 %v651, 2147483648
    %v664 = vxor.u32 %v652, 2147483648
    %v665 = vxor.u32 %v653, 2147483648
    %v666 = vxor.u32 %v654, 2147483648
    %v667 = vmul.f32 %v655, 1.442695
    %v668 = vpow.pop %v667
    %v669 = vmul.f32 %v656, 1.442695
    %v670 = vpow.pop %v669
    %v671 = vmul.f32 %v657, 1.442695
    %v672 = vpow.pop %v671
    %v673 = vmul.f32 %v658, 1.442695
    %v674 = vpow.pop %v673
    %v675 = vmul.f32 %v659, 1.442695
    %v676 = vpow.pop %v675
    %v677 = vmul.f32 %v660, 1.442695
    %v678 = vpow.pop %v677
    %v679 = vmul.f32 %v661, 1.442695
    %v680 = vpow.pop %v679
    %v681 = vmul.f32 %v662, 1.442695
    %v682 = vpow.pop %v681
    %v683 = vmul.f32 %v663, 1.442695
    %v684 = vpow.pop %v683
    %v685 = vmul.f32 %v664, 1.442695
    %v686 = vpow.pop %v685
    %v687 = vmul.f32 %v665, 1.442695
    %v688 = vpow.pop %v687
    %v689 = vmul.f32 %v666, 1.442695
    %v690 = vpow.pop %v689
    %v691 = vadd.f32 %v668, 1.0
    %v692 = vadd.f32 %v670, 1.0
    %v693 = vadd.f32 %v672, 1.0
    %v694 = vadd.f32 %v674, 1.0
    %v695 = vadd.f32 %v676, 1.0
    %v696 = vadd.f32 %v678, 1.0
    %v697 = vadd.f32 %v680, 1.0
    %v698 = vadd.f32 %v682, 1.0
    %v699 = vadd.f32 %v684, 1.0
    %v700 = vadd.f32 %v686, 1.0
    %v701 = vadd.f32 %v688, 1.0
    %v702 = vadd.f32 %v690, 1.0
    %v703 = vrcp.pop %v691
    %v704 = vmul.f32 %v691, %v703
    %v705 = vsub.f32 1.0, %v704
    %v706 = vmul.f32 %v703, %v705
    %v707 = vadd.f32 %v703, %v706
    %vm708 = vweird.f32 %v691
    %vm709 = vweird.f32 %v703
    %vm710 = vmor %vm708, %vm709
    %v711 = vsel %vm710, %v703, %v707
    %v712 = vand.u32 2147483647, %v691
    %vm713 = vcmp.eq.f32.partialorder %v712, 8.507059e+37
    %v714 = vand.u32 %v691, 2147483648
    %v715 = vor.u32 1.1754944e-38, %v714
    %v716 = vsel %vm713, %v715, %v711
    %v717 = vmul.f32 1.0, %v716
    %v718 = vrcp.pop %v692
    %v719 = vmul.f32 %v692, %v718
    %v720 = vsub.f32 1.0, %v719
    %v721 = vmul.f32 %v718, %v720
    %v722 = vadd.f32 %v718, %v721
    %vm723 = vweird.f32 %v692
    %vm724 = vweird.f32 %v718
    %vm725 = vmor %vm723, %vm724
    %v726 = vsel %vm725, %v718, %v722
    %v727 = vand.u32 2147483647, %v692
    %vm728 = vcmp.eq.f32.partialorder %v727, 8.507059e+37
    %v729 = vand.u32 %v692, 2147483648
    %v730 = vor.u32 1.1754944e-38, %v729
    %v731 = vsel %vm728, %v730, %v726
    %v732 = vmul.f32 1.0, %v731
    %v733 = vrcp.pop %v693
    %v734 = vmul.f32 %v693, %v733
    %v735 = vsub.f32 1.0, %v734
    %v736 = vmul.f32 %v733, %v735
    %v737 = vadd.f32 %v733, %v736
    %vm738 = vweird.f32 %v693
    %vm739 = vweird.f32 %v733
    %vm740 = vmor %vm738, %vm739
    %v741 = vsel %vm740, %v733, %v737
    %v742 = vand.u32 2147483647, %v693
    %vm743 = vcmp.eq.f32.partialorder %v742, 8.507059e+37
    %v744 = vand.u32 %v693, 2147483648
    %v745 = vor.u32 1.1754944e-38, %v744
    %v746 = vsel %vm743, %v745, %v741
    %v747 = vmul.f32 1.0, %v746
    %v748 = vrcp.pop %v694
    %v749 = vmul.f32 %v694, %v748
    %v750 = vsub.f32 1.0, %v749
    %v751 = vmul.f32 %v748, %v750
    %v752 = vadd.f32 %v748, %v751
    %vm753 = vweird.f32 %v694
    %vm754 = vweird.f32 %v748
    %vm755 = vmor %vm753, %vm754
    %v756 = vsel %vm755, %v748, %v752
    %v757 = vand.u32 2147483647, %v694
    %vm758 = vcmp.eq.f32.partialorder %v757, 8.507059e+37
    %v759 = vand.u32 %v694, 2147483648
    %v760 = vor.u32 1.1754944e-38, %v759
    %v761 = vsel %vm758, %v760, %v756
    %v762 = vmul.f32 1.0, %v761
    %v763 = vrcp.pop %v695
    %v764 = vmul.f32 %v695, %v763
    %v765 = vsub.f32 1.0, %v764
    %v766 = vmul.f32 %v763, %v765
    %v767 = vadd.f32 %v763, %v766
    %vm768 = vweird.f32 %v695
    %vm769 = vweird.f32 %v763
    %vm770 = vmor %vm768, %vm769
    %v771 = vsel %vm770, %v763, %v767
    %v772 = vand.u32 2147483647, %v695
    %vm773 = vcmp.eq.f32.partialorder %v772, 8.507059e+37
    %v774 = vand.u32 %v695, 2147483648
    %v775 = vor.u32 1.1754944e-38, %v774
    %v776 = vsel %vm773, %v775, %v771
    %v777 = vmul.f32 1.0, %v776
    %v778 = vrcp.pop %v696
    %v779 = vmul.f32 %v696, %v778
    %v780 = vsub.f32 1.0, %v779
    %v781 = vmul.f32 %v778, %v780
    %v782 = vadd.f32 %v778, %v781
    %vm783 = vweird.f32 %v696
    %vm784 = vweird.f32 %v778
    %vm785 = vmor %vm783, %vm784
    %v786 = vsel %vm785, %v778, %v782
    %v787 = vand.u32 2147483647, %v696
    %vm788 = vcmp.eq.f32.partialorder %v787, 8.507059e+37
    %v789 = vand.u32 %v696, 2147483648
    %v790 = vor.u32 1.1754944e-38, %v789
    %v791 = vsel %vm788, %v790, %v786
    %v792 = vmul.f32 1.0, %v791
    %v793 = vrcp.pop %v697
    %v794 = vmul.f32 %v697, %v793
    %v795 = vsub.f32 1.0, %v794
    %v796 = vmul.f32 %v793, %v795
    %v797 = vadd.f32 %v793, %v796
    %vm798 = vweird.f32 %v697
    %vm799 = vweird.f32 %v793
    %vm800 = vmor %vm798, %vm799
    %v801 = vsel %vm800, %v793, %v797
    %v802 = vand.u32 2147483647, %v697
    %vm803 = vcmp.eq.f32.partialorder %v802, 8.507059e+37
    %v804 = vand.u32 %v697, 2147483648
    %v805 = vor.u32 1.1754944e-38, %v804
    %v806 = vsel %vm803, %v805, %v801
    %v807 = vmul.f32 1.0, %v806
    %v808 = vrcp.pop %v698
    %v809 = vmul.f32 %v698, %v808
    %v810 = vsub.f32 1.0, %v809
    %v811 = vmul.f32 %v808, %v810
    %v812 = vadd.f32 %v808, %v811
    %vm813 = vweird.f32 %v698
    %vm814 = vweird.f32 %v808
    %vm815 = vmor %vm813, %vm814
    %v816 = vsel %vm815, %v808, %v812
    %v817 = vand.u32 2147483647, %v698
    %vm818 = vcmp.eq.f32.partialorder %v817, 8.507059e+37
    %v819 = vand.u32 %v698, 2147483648
    %v820 = vor.u32 1.1754944e-38, %v819
    %v821 = vsel %vm818, %v820, %v816
    %v822 = vmul.f32 1.0, %v821
    %v823 = vrcp.pop %v699
    %v824 = vmul.f32 %v699, %v823
    %v825 = vsub.f32 1.0, %v824
    %v826 = vmul.f32 %v823, %v825
    %v827 = vadd.f32 %v823, %v826
    %vm828 = vweird.f32 %v699
    %vm829 = vweird.f32 %v823
    %vm830 = vmor %vm828, %vm829
    %v831 = vsel %vm830, %v823, %v827
    %v832 = vand.u32 2147483647, %v699
    %vm833 = vcmp.eq.f32.partialorder %v832, 8.507059e+37
    %v834 = vand.u32 %v699, 2147483648
    %v835 = vor.u32 1.1754944e-38, %v834
    %v836 = vsel %vm833, %v835, %v831
    %v837 = vmul.f32 1.0, %v836
    %v838 = vrcp.pop %v700
    %v839 = vmul.f32 %v700, %v838
    %v840 = vsub.f32 1.0, %v839
    %v841 = vmul.f32 %v838, %v840
    %v842 = vadd.f32 %v838, %v841
    %vm843 = vweird.f32 %v700
    %vm844 = vweird.f32 %v838
    %vm845 = vmor %vm843, %vm844
    %v846 = vsel %vm845, %v838, %v842
    %v847 = vand.u32 2147483647, %v700
    %vm848 = vcmp.eq.f32.partialorder %v847, 8.507059e+37
    %v849 = vand.u32 %v700, 2147483648
    %v850 = vor.u32 1.1754944e-38, %v849
    %v851 = vsel %vm848, %v850, %v846
    %v852 = vmul.f32 1.0, %v851
    %v853 = vrcp.pop %v701
    %v854 = vmul.f32 %v701, %v853
    %v855 = vsub.f32 1.0, %v854
    %v856 = vmul.f32 %v853, %v855
    %v857 = vadd.f32 %v853, %v856
    %vm858 = vweird.f32 %v701
    %vm859 = vweird.f32 %v853
    %vm860 = vmor %vm858, %vm859
    %v861 = vsel %vm860, %v853, %v857
    %v862 = vand.u32 2147483647, %v701
    %vm863 = vcmp.eq.f32.partialorder %v862, 8.507059e+37
    %v864 = vand.u32 %v701, 2147483648
    %v865 = vor.u32 1.1754944e-38, %v864
    %v866 = vsel %vm863, %v865, %v861
    %v867 = vmul.f32 1.0, %v866
    %v868 = vrcp.pop %v702
    %v869 = vmul.f32 %v702, %v868
    %v870 = vsub.f32 1.0, %v869
    %v871 = vmul.f32 %v868, %v870
    %v872 = vadd.f32 %v868, %v871
    %vm873 = vweird.f32 %v702
    %vm874 = vweird.f32 %v868
    %vm875 = vmor %vm873, %vm874
    %v876 = vsel %vm875, %v868, %v872
    %v877 = vand.u32 2147483647, %v702
    %vm878 = vcmp.eq.f32.partialorder %v877, 8.507059e+37
    %v879 = vand.u32 %v702, 2147483648
    %v880 = vor.u32 1.1754944e-38, %v879
    %v881 = vsel %vm878, %v880, %v876
    %v882 = vmul.f32 1.0, %v881
    %v883 = vmax.f32 %v717, %v732
    %v884 = vmax.f32 %v747, %v762
    %v885 = vmax.f32 %v777, %v792
    %v886 = vmax.f32 %v807, %v822
    %v887 = vmax.f32 %v837, %v852
    %v888 = vmax.f32 %v867, %v882
    %889 = vst [vmem:[#allocation2] sm:$0xff] %v883
    %890 = vst [vmem:[#allocation2 + $0x8] sm:$0xff] %v884
    %891 = vst [vmem:[#allocation2 + $0x10] sm:$0xff] %v885
    %892 = vst [vmem:[#allocation2 + $0x18] sm:$0xff] %v886
    %893 = vst [vmem:[#allocation2 + $0x20] sm:$0xff] %v887
    %894 = vst [vmem:[#allocation2 + $0x28] sm:$0xff] %v888
    %v895 = vld [vmem:[#allocation2] ss:$2 sm:$0xff]
    %s896 = scalar_lea.vmem [#allocation2], 24
    %v897 = vld [vmem:[%s896] ss:$2 sm:$0xff]
    %s898 = scalar_lea.vmem [#allocation2], 1
    %v899 = vld [vmem:[%s898] ss:$2 sm:$0xff]
    %s900 = scalar_lea.vmem [#allocation2], 25
    %v901 = vld [vmem:[%s900] ss:$2 sm:$0xff]
    %v902 = vmax.f32 %v895, %v899
    %v903 = vmax.f32 %v897, %v901
    %v904 = vld [vmem:[#allocation4] sm:$0xff]
    %v905 = vld [vmem:[#allocation4 + $0x8] sm:$0xff]
    %v906 = vld [vmem:[#allocation4 + $0x10] sm:$0xff]
    %v907 = vld [vmem:[#allocation4 + $0x18] sm:$0xff]
    %v908 = vld [vmem:[#allocation4 + $0x20] sm:$0xff]
    %v909 = vld [vmem:[#allocation4 + $0x28] sm:$0xff]
    %v910 = vld [vmem:[#allocation4 + $0x30] sm:$0xff]
    %v911 = vld [vmem:[#allocation4 + $0x38] sm:$0xff]
    %v912 = vld [vmem:[#allocation4 + $0x40] sm:$0xff]
    %v913 = vld [vmem:[#allocation4 + $0x48] sm:$0xff]
    %v914 = vld [vmem:[#allocation4 + $0x50] sm:$0xff]
    %v915 = vld [vmem:[#allocation4 + $0x58] sm:$0xff]
    %v916 = vld [vmem:[#allocation4 + $0x60] sm:$0xff]
    %v917 = vld [vmem:[#allocation4 + $0x68] sm:$0xff]
    %v918 = vld [vmem:[#allocation4 + $0x70] sm:$0xff]
    %v919 = vld [vmem:[#allocation4 + $0x78] sm:$0xff]
    %v920 = vld [vmem:[#allocation4 + $0x80] sm:$0xff]
    %v921 = vld [vmem:[#allocation4 + $0x88] sm:$0xff]
    %v922 = vld [vmem:[#allocation4 + $0x90] sm:$0xff]
    %v923 = vld [vmem:[#allocation4 + $0x98] sm:$0xff]
    %v924 = vld [vmem:[#allocation4 + $0xa0] sm:$0xff]
    %v925 = vld [vmem:[#allocation4 + $0xa8] sm:$0xff]
    %v926 = vld [vmem:[#allocation4 + $0xb0] sm:$0xff]
    %v927 = vld [vmem:[#allocation4 + $0xb8] sm:$0xff]
    %v928 = vld [vmem:[#allocation4 + $0xc0] sm:$0xff]
    %v929 = vld [vmem:[#allocation4 + $0xc8] sm:$0xff]
    %v930 = vld [vmem:[#allocation4 + $0xd0] sm:$0xff]
    %v931 = vld [vmem:[#allocation4 + $0xd8] sm:$0xff]
    %v932 = vld [vmem:[#allocation4 + $0xe0] sm:$0xff]
    %v933 = vld [vmem:[#allocation4 + $0xe8] sm:$0xff]
    %v934 = vld [vmem:[#allocation4 + $0xf0] sm:$0xff]
    %v935 = vld [vmem:[#allocation4 + $0xf8] sm:$0xff]
    %s936 = scalar_lea.vmem [#allocation2], 2
    %v937 = vld [vmem:[%s936] ss:$2 sm:$0xff]
    %s938 = scalar_lea.vmem [#allocation2], 26
    %v939 = vld [vmem:[%s938] ss:$2 sm:$0xff]
    %s940 = scalar_lea.vmem [#allocation2], 3
    %v941 = vld [vmem:[%s940] ss:$2 sm:$0xff]
    %s942 = scalar_lea.vmem [#allocation2], 27
    %v943 = vld [vmem:[%s942] ss:$2 sm:$0xff]
    %v944 = vmax.f32 %v937, %v941
    %v945 = vmax.f32 %v939, %v943
    %s946 = scalar_lea.vmem [#allocation4], 256
    %v947 = vld [vmem:[%s946] sm:$0xff]
    %v948 = vld [vmem:[%s946 + $0x8] sm:$0xff]
    %v949 = vld [vmem:[%s946 + $0x10] sm:$0xff]
    %v950 = vld [vmem:[%s946 + $0x18] sm:$0xff]
    %v951 = vld [vmem:[%s946 + $0x20] sm:$0xff]
    %v952 = vld [vmem:[%s946 + $0x28] sm:$0xff]
    %v953 = vld [vmem:[%s946 + $0x30] sm:$0xff]
    %v954 = vld [vmem:[%s946 + $0x38] sm:$0xff]
    %v955 = vld [vmem:[%s946 + $0x40] sm:$0xff]
    %v956 = vld [vmem:[%s946 + $0x48] sm:$0xff]
    %v957 = vld [vmem:[%s946 + $0x50] sm:$0xff]
    %v958 = vld [vmem:[%s946 + $0x58] sm:$0xff]
    %v959 = vld [vmem:[%s946 + $0x60] sm:$0xff]
    %v960 = vld [vmem:[%s946 + $0x68] sm:$0xff]
    %v961 = vld [vmem:[%s946 + $0x70] sm:$0xff]
    %v962 = vld [vmem:[%s946 + $0x78] sm:$0xff]
    %v963 = vld [vmem:[%s946 + $0x80] sm:$0xff]
    %v964 = vld [vmem:[%s946 + $0x88] sm:$0xff]
    %v965 = vld [vmem:[%s946 + $0x90] sm:$0xff]
    %v966 = vld [vmem:[%s946 + $0x98] sm:$0xff]
    %v967 = vld [vmem:[%s946 + $0xa0] sm:$0xff]
    %v968 = vld [vmem:[%s946 + $0xa8] sm:$0xff]
    %v969 = vld [vmem:[%s946 + $0xb0] sm:$0xff]
    %v970 = vld [vmem:[%s946 + $0xb8] sm:$0xff]
    %v971 = vld [vmem:[%s946 + $0xc0] sm:$0xff]
    %v972 = vld [vmem:[%s946 + $0xc8] sm:$0xff]
    %v973 = vld [vmem:[%s946 + $0xd0] sm:$0xff]
    %v974 = vld [vmem:[%s946 + $0xd8] sm:$0xff]
    %v975 = vld [vmem:[%s946 + $0xe0] sm:$0xff]
    %v976 = vld [vmem:[%s946 + $0xe8] sm:$0xff]
    %v977 = vld [vmem:[%s946 + $0xf0] sm:$0xff]
    %v978 = vld [vmem:[%s946 + $0xf8] sm:$0xff]
    %979 = vmatpush.msra.mxu0 %v977
    %980 = vmatpush.msra.mxu0 %v975
    %981 = vmatpush.msra.mxu0 %v973
    %982 = vmatpush.msra.mxu0 %v971
    %983 = vmatpush.msra.mxu0 %v969
    %984 = vmatpush.msra.mxu0 %v967
    %985 = vmatpush.msra.mxu0 %v965
    %986 = vmatpush.msra.mxu0 %v963
    %987 = vmatpush.msra.mxu0 %v961
    %988 = vmatpush.msra.mxu0 %v959
    %989 = vmatpush.msra.mxu0 %v957
    %990 = vmatpush.msra.mxu0 %v955
    %991 = vmatpush.msra.mxu0 %v953
    %992 = vmatpush.msra.mxu0 %v951
    %993 = vmatpush.msra.mxu0 %v949
    %994 = vmatpush.msra.mxu0 %v947
    %995 = vmatmul.f32.gmra.mxu0 %v944
    %v996 = vpop.f32.mrf.mxu0
    %v997 = vadd.f32 0.0, %v996
    %998 = vmatmul.f32.gmra.mxu0 %v945
    %v999 = vpop.f32.mrf.mxu0
    %v1000 = vadd.f32 0.0, %v999
    %1001 = vdwg.mxu0
    %1002 = vmatpush.msra.mxu0 %v978
    %1003 = vmatpush.msra.mxu0 %v976
    %1004 = vmatpush.msra.mxu0 %v974
    %1005 = vmatpush.msra.mxu0 %v972
    %1006 = vmatpush.msra.mxu0 %v970
    %1007 = vmatpush.msra.mxu0 %v968
    %1008 = vmatpush.msra.mxu0 %v966
    %1009 = vmatpush.msra.mxu0 %v964
    %1010 = vmatpush.msra.mxu0 %v962
    %1011 = vmatpush.msra.mxu0 %v960
    %1012 = vmatpush.msra.mxu0 %v958
    %1013 = vmatpush.msra.mxu0 %v956
    %1014 = vmatpush.msra.mxu0 %v954
    %1015 = vmatpush.msra.mxu0 %v952
    %1016 = vmatpush.msra.mxu0 %v950
    %1017 = vmatpush.msra.mxu0 %v948
    %1018 = vmatmul.f32.gmra.mxu0 %v944
    %v1019 = vpop.f32.mrf.mxu0
    %v1020 = vadd.f32 0.0, %v1019
    %1021 = vmatmul.f32.gmra.mxu0 %v945
    %v1022 = vpop.f32.mrf.mxu0
    %v1023 = vadd.f32 0.0, %v1022
    %1024 = vdwg.mxu0
    %1025 = vmatpush.msra.mxu0 %v934
    %1026 = vmatpush.msra.mxu0 %v932
    %1027 = vmatpush.msra.mxu0 %v930
    %1028 = vmatpush.msra.mxu0 %v928
    %1029 = vmatpush.msra.mxu0 %v926
    %1030 = vmatpush.msra.mxu0 %v924
    %1031 = vmatpush.msra.mxu0 %v922
    %1032 = vmatpush.msra.mxu0 %v920
    %1033 = vmatpush.msra.mxu0 %v918
    %1034 = vmatpush.msra.mxu0 %v916
    %1035 = vmatpush.msra.mxu0 %v914
    %1036 = vmatpush.msra.mxu0 %v912
    %1037 = vmatpush.msra.mxu0 %v910
    %1038 = vmatpush.msra.mxu0 %v908
    %1039 = vmatpush.msra.mxu0 %v906
    %1040 = vmatpush.msra.mxu0 %v904
    %1041 = vmatmul.f32.gmra.mxu0 %v902
    %v1042 = vpop.f32.mrf.mxu0
    %v1043 = vadd.f32 %v997, %v1042
    %1044 = vmatmul.f32.gmra.mxu0 %v903
    %v1045 = vpop.f32.mrf.mxu0
    %v1046 = vadd.f32 %v1000, %v1045
    %1047 = vdwg.mxu0
    %1048 = vmatpush.msra.mxu0 %v935
    %1049 = vmatpush.msra.mxu0 %v933
    %1050 = vmatpush.msra.mxu0 %v931
    %1051 = vmatpush.msra.mxu0 %v929
    %1052 = vmatpush.msra.mxu0 %v927
    %1053 = vmatpush.msra.mxu0 %v925
    %1054 = vmatpush.msra.mxu0 %v923
    %1055 = vmatpush.msra.mxu0 %v921
    %1056 = vmatpush.msra.mxu0 %v919
    %1057 = vmatpush.msra.mxu0 %v917
    %1058 = vmatpush.msra.mxu0 %v915
    %1059 = vmatpush.msra.mxu0 %v913
    %1060 = vmatpush.msra.mxu0 %v911
    %1061 = vmatpush.msra.mxu0 %v909
    %1062 = vmatpush.msra.mxu0 %v907
    %1063 = vmatpush.msra.mxu0 %v905
    %1064 = vmatmul.f32.gmra.mxu0 %v902
    %v1065 = vpop.f32.mrf.mxu0
    %v1066 = vadd.f32 %v1020, %v1065
    %1067 = vmatmul.f32.gmra.mxu0 %v903
    %v1068 = vpop.f32.mrf.mxu0
    %v1069 = vadd.f32 %v1023, %v1068
    %1070 = vdwg.mxu0
    %s1071 = scalar_lea.vmem [#allocation2], 4
    %v1072 = vld [vmem:[%s1071] ss:$2 sm:$0xff]
    %s1073 = scalar_lea.vmem [#allocation2], 28
    %v1074 = vld [vmem:[%s1073] ss:$2 sm:$0xff]
    %s1075 = scalar_lea.vmem [#allocation2], 5
    %v1076 = vld [vmem:[%s1075] ss:$2 sm:$0xff]
    %s1077 = scalar_lea.vmem [#allocation2], 29
    %v1078 = vld [vmem:[%s1077] ss:$2 sm:$0xff]
    %v1079 = vmax.f32 %v1072, %v1076
    %v1080 = vmax.f32 %v1074, %v1078
    %s1081 = scalar_lea.vmem [#allocation4], 512
    %v1082 = vld [vmem:[%s1081] sm:$0xff]
    %v1083 = vld [vmem:[%s1081 + $0x8] sm:$0xff]
    %v1084 = vld [vmem:[%s1081 + $0x10] sm:$0xff]
    %v1085 = vld [vmem:[%s1081 + $0x18] sm:$0xff]
    %v1086 = vld [vmem:[%s1081 + $0x20] sm:$0xff]
    %v1087 = vld [vmem:[%s1081 + $0x28] sm:$0xff]
    %v1088 = vld [vmem:[%s1081 + $0x30] sm:$0xff]
    %v1089 = vld [vmem:[%s1081 + $0x38] sm:$0xff]
    %v1090 = vld [vmem:[%s1081 + $0x40] sm:$0xff]
    %v1091 = vld [vmem:[%s1081 + $0x48] sm:$0xff]
    %v1092 = vld [vmem:[%s1081 + $0x50] sm:$0xff]
    %v1093 = vld [vmem:[%s1081 + $0x58] sm:$0xff]
    %v1094 = vld [vmem:[%s1081 + $0x60] sm:$0xff]
    %v1095 = vld [vmem:[%s1081 + $0x68] sm:$0xff]
    %v1096 = vld [vmem:[%s1081 + $0x70] sm:$0xff]
    %v1097 = vld [vmem:[%s1081 + $0x78] sm:$0xff]
    %v1098 = vld [vmem:[%s1081 + $0x80] sm:$0xff]
    %v1099 = vld [vmem:[%s1081 + $0x88] sm:$0xff]
    %v1100 = vld [vmem:[%s1081 + $0x90] sm:$0xff]
    %v1101 = vld [vmem:[%s1081 + $0x98] sm:$0xff]
    %v1102 = vld [vmem:[%s1081 + $0xa0] sm:$0xff]
    %v1103 = vld [vmem:[%s1081 + $0xa8] sm:$0xff]
    %v1104 = vld [vmem:[%s1081 + $0xb0] sm:$0xff]
    %v1105 = vld [vmem:[%s1081 + $0xb8] sm:$0xff]
    %v1106 = vld [vmem:[%s1081 + $0xc0] sm:$0xff]
    %v1107 = vld [vmem:[%s1081 + $0xc8] sm:$0xff]
    %v1108 = vld [vmem:[%s1081 + $0xd0] sm:$0xff]
    %v1109 = vld [vmem:[%s1081 + $0xd8] sm:$0xff]
    %v1110 = vld [vmem:[%s1081 + $0xe0] sm:$0xff]
    %v1111 = vld [vmem:[%s1081 + $0xe8] sm:$0xff]
    %v1112 = vld [vmem:[%s1081 + $0xf0] sm:$0xff]
    %v1113 = vld [vmem:[%s1081 + $0xf8] sm:$0xff]
    %1114 = vmatpush.msra.mxu0 %v1112
    %1115 = vmatpush.msra.mxu0 %v1110
    %1116 = vmatpush.msra.mxu0 %v1108
    %1117 = vmatpush.msra.mxu0 %v1106
    %1118 = vmatpush.msra.mxu0 %v1104
    %1119 = vmatpush.msra.mxu0 %v1102
    %1120 = vmatpush.msra.mxu0 %v1100
    %1121 = vmatpush.msra.mxu0 %v1098
    %1122 = vmatpush.msra.mxu0 %v1096
    %1123 = vmatpush.msra.mxu0 %v1094
    %1124 = vmatpush.msra.mxu0 %v1092
    %1125 = vmatpush.msra.mxu0 %v1090
    %1126 = vmatpush.msra.mxu0 %v1088
    %1127 = vmatpush.msra.mxu0 %v1086
    %1128 = vmatpush.msra.mxu0 %v1084
    %1129 = vmatpush.msra.mxu0 %v1082
    %1130 = vmatmul.f32.gmra.mxu0 %v1079
    %v1131 = vpop.f32.mrf.mxu0
    %v1132 = vadd.f32 0.0, %v1131
    %1133 = vmatmul.f32.gmra.mxu0 %v1080
    %v1134 = vpop.f32.mrf.mxu0
    %v1135 = vadd.f32 0.0, %v1134
    %1136 = vdwg.mxu0
    %1137 = vmatpush.msra.mxu0 %v1113
    %1138 = vmatpush.msra.mxu0 %v1111
    %1139 = vmatpush.msra.mxu0 %v1109
    %1140 = vmatpush.msra.mxu0 %v1107
    %1141 = vmatpush.msra.mxu0 %v1105
    %1142 = vmatpush.msra.mxu0 %v1103
    %1143 = vmatpush.msra.mxu0 %v1101
    %1144 = vmatpush.msra.mxu0 %v1099
    %1145 = vmatpush.msra.mxu0 %v1097
    %1146 = vmatpush.msra.mxu0 %v1095
    %1147 = vmatpush.msra.mxu0 %v1093
    %1148 = vmatpush.msra.mxu0 %v1091
    %1149 = vmatpush.msra.mxu0 %v1089
    %1150 = vmatpush.msra.mxu0 %v1087
    %1151 = vmatpush.msra.mxu0 %v1085
    %1152 = vmatpush.msra.mxu0 %v1083
    %1153 = vmatmul.f32.gmra.mxu0 %v1079
    %v1154 = vpop.f32.mrf.mxu0
    %v1155 = vadd.f32 0.0, %v1154
    %1156 = vmatmul.f32.gmra.mxu0 %v1080
    %v1157 = vpop.f32.mrf.mxu0
    %v1158 = vadd.f32 0.0, %v1157
    %1159 = vdwg.mxu0
    %v1160 = vadd.f32 %v1043, %v1132
    %v1161 = vadd.f32 %v1066, %v1155
    %v1162 = vadd.f32 %v1046, %v1135
    %v1163 = vadd.f32 %v1069, %v1158
    %s1164 = scalar_lea.vmem [#allocation2], 6
    %v1165 = vld [vmem:[%s1164] ss:$2 sm:$0xff]
    %s1166 = scalar_lea.vmem [#allocation2], 30
    %v1167 = vld [vmem:[%s1166] ss:$2 sm:$0xff]
    %s1168 = scalar_lea.vmem [#allocation2], 7
    %v1169 = vld [vmem:[%s1168] ss:$2 sm:$0xff]
    %s1170 = scalar_lea.vmem [#allocation2], 31
    %v1171 = vld [vmem:[%s1170] ss:$2 sm:$0xff]
    %v1172 = vmax.f32 %v1165, %v1169
    %v1173 = vmax.f32 %v1167, %v1171
    %s1174 = scalar_lea.vmem [#allocation4], 768
    %v1175 = vld [vmem:[%s1174] sm:$0xff]
    %v1176 = vld [vmem:[%s1174 + $0x8] sm:$0xff]
    %v1177 = vld [vmem:[%s1174 + $0x10] sm:$0xff]
    %v1178 = vld [vmem:[%s1174 + $0x18] sm:$0xff]
    %v1179 = vld [vmem:[%s1174 + $0x20] sm:$0xff]
    %v1180 = vld [vmem:[%s1174 + $0x28] sm:$0xff]
    %v1181 = vld [vmem:[%s1174 + $0x30] sm:$0xff]
    %v1182 = vld [vmem:[%s1174 + $0x38] sm:$0xff]
    %v1183 = vld [vmem:[%s1174 + $0x40] sm:$0xff]
    %v1184 = vld [vmem:[%s1174 + $0x48] sm:$0xff]
    %v1185 = vld [vmem:[%s1174 + $0x50] sm:$0xff]
    %v1186 = vld [vmem:[%s1174 + $0x58] sm:$0xff]
    %v1187 = vld [vmem:[%s1174 + $0x60] sm:$0xff]
    %v1188 = vld [vmem:[%s1174 + $0x68] sm:$0xff]
    %v1189 = vld [vmem:[%s1174 + $0x70] sm:$0xff]
    %v1190 = vld [vmem:[%s1174 + $0x78] sm:$0xff]
    %v1191 = vld [vmem:[%s1174 + $0x80] sm:$0xff]
    %v1192 = vld [vmem:[%s1174 + $0x88] sm:$0xff]
    %v1193 = vld [vmem:[%s1174 + $0x90] sm:$0xff]
    %v1194 = vld [vmem:[%s1174 + $0x98] sm:$0xff]
    %v1195 = vld [vmem:[%s1174 + $0xa0] sm:$0xff]
    %v1196 = vld [vmem:[%s1174 + $0xa8] sm:$0xff]
    %v1197 = vld [vmem:[%s1174 + $0xb0] sm:$0xff]
    %v1198 = vld [vmem:[%s1174 + $0xb8] sm:$0xff]
    %v1199 = vld [vmem:[%s1174 + $0xc0] sm:$0xff]
    %v1200 = vld [vmem:[%s1174 + $0xc8] sm:$0xff]
    %v1201 = vld [vmem:[%s1174 + $0xd0] sm:$0xff]
    %v1202 = vld [vmem:[%s1174 + $0xd8] sm:$0xff]
    %v1203 = vld [vmem:[%s1174 + $0xe0] sm:$0xff]
    %v1204 = vld [vmem:[%s1174 + $0xe8] sm:$0xff]
    %v1205 = vld [vmem:[%s1174 + $0xf0] sm:$0xff]
    %v1206 = vld [vmem:[%s1174 + $0xf8] sm:$0xff]
    %1207 = vmatpush.msra.mxu0 %v1205
    %1208 = vmatpush.msra.mxu0 %v1203
    %1209 = vmatpush.msra.mxu0 %v1201
    %1210 = vmatpush.msra.mxu0 %v1199
    %1211 = vmatpush.msra.mxu0 %v1197
    %1212 = vmatpush.msra.mxu0 %v1195
    %1213 = vmatpush.msra.mxu0 %v1193
    %1214 = vmatpush.msra.mxu0 %v1191
    %1215 = vmatpush.msra.mxu0 %v1189
    %1216 = vmatpush.msra.mxu0 %v1187
    %1217 = vmatpush.msra.mxu0 %v1185
    %1218 = vmatpush.msra.mxu0 %v1183
    %1219 = vmatpush.msra.mxu0 %v1181
    %1220 = vmatpush.msra.mxu0 %v1179
    %1221 = vmatpush.msra.mxu0 %v1177
    %1222 = vmatpush.msra.mxu0 %v1175
    %1223 = vmatmul.f32.gmra.mxu0 %v1172
    %v1224 = vpop.f32.mrf.mxu0
    %v1225 = vadd.f32 0.0, %v1224
    %1226 = vmatmul.f32.gmra.mxu0 %v1173
    %v1227 = vpop.f32.mrf.mxu0
    %v1228 = vadd.f32 0.0, %v1227
    %1229 = vdwg.mxu0
    %1230 = vmatpush.msra.mxu0 %v1206
    %1231 = vmatpush.msra.mxu0 %v1204
    %1232 = vmatpush.msra.mxu0 %v1202
    %1233 = vmatpush.msra.mxu0 %v1200
    %1234 = vmatpush.msra.mxu0 %v1198
    %1235 = vmatpush.msra.mxu0 %v1196
    %1236 = vmatpush.msra.mxu0 %v1194
    %1237 = vmatpush.msra.mxu0 %v1192
    %1238 = vmatpush.msra.mxu0 %v1190
    %1239 = vmatpush.msra.mxu0 %v1188
    %1240 = vmatpush.msra.mxu0 %v1186
    %1241 = vmatpush.msra.mxu0 %v1184
    %1242 = vmatpush.msra.mxu0 %v1182
    %1243 = vmatpush.msra.mxu0 %v1180
    %1244 = vmatpush.msra.mxu0 %v1178
    %1245 = vmatpush.msra.mxu0 %v1176
    %1246 = vmatmul.f32.gmra.mxu0 %v1172
    %v1247 = vpop.f32.mrf.mxu0
    %v1248 = vadd.f32 0.0, %v1247
    %1249 = vmatmul.f32.gmra.mxu0 %v1173
    %v1250 = vpop.f32.mrf.mxu0
    %v1251 = vadd.f32 0.0, %v1250
    %1252 = vdwg.mxu0
    %v1253 = vadd.f32 %v1160, %v1225
    %v1254 = vadd.f32 %v1161, %v1248
    %v1255 = vadd.f32 %v1162, %v1228
    %v1256 = vadd.f32 %v1163, %v1251
    %s1257 = scalar_lea.vmem [#allocation2], 8
    %v1258 = vld [vmem:[%s1257] ss:$2 sm:$0xff]
    %s1259 = scalar_lea.vmem [#allocation2], 32
    %v1260 = vld [vmem:[%s1259] ss:$2 sm:$0xff]
    %s1261 = scalar_lea.vmem [#allocation2], 9
    %v1262 = vld [vmem:[%s1261] ss:$2 sm:$0xff]
    %s1263 = scalar_lea.vmem [#allocation2], 33
    %v1264 = vld [vmem:[%s1263] ss:$2 sm:$0xff]
    %v1265 = vmax.f32 %v1258, %v1262
    %v1266 = vmax.f32 %v1260, %v1264
    %s1267 = scalar_lea.vmem [#allocation4], 1024
    %v1268 = vld [vmem:[%s1267] sm:$0xff]
    %v1269 = vld [vmem:[%s1267 + $0x8] sm:$0xff]
    %v1270 = vld [vmem:[%s1267 + $0x10] sm:$0xff]
    %v1271 = vld [vmem:[%s1267 + $0x18] sm:$0xff]
    %v1272 = vld [vmem:[%s1267 + $0x20] sm:$0xff]
    %v1273 = vld [vmem:[%s1267 + $0x28] sm:$0xff]
    %v1274 = vld [vmem:[%s1267 + $0x30] sm:$0xff]
    %v1275 = vld [vmem:[%s1267 + $0x38] sm:$0xff]
    %v1276 = vld [vmem:[%s1267 + $0x40] sm:$0xff]
    %v1277 = vld [vmem:[%s1267 + $0x48] sm:$0xff]
    %v1278 = vld [vmem:[%s1267 + $0x50] sm:$0xff]
    %v1279 = vld [vmem:[%s1267 + $0x58] sm:$0xff]
    %v1280 = vld [vmem:[%s1267 + $0x60] sm:$0xff]
    %v1281 = vld [vmem:[%s1267 + $0x68] sm:$0xff]
    %v1282 = vld [vmem:[%s1267 + $0x70] sm:$0xff]
    %v1283 = vld [vmem:[%s1267 + $0x78] sm:$0xff]
    %v1284 = vld [vmem:[%s1267 + $0x80] sm:$0xff]
    %v1285 = vld [vmem:[%s1267 + $0x88] sm:$0xff]
    %v1286 = vld [vmem:[%s1267 + $0x90] sm:$0xff]
    %v1287 = vld [vmem:[%s1267 + $0x98] sm:$0xff]
    %v1288 = vld [vmem:[%s1267 + $0xa0] sm:$0xff]
    %v1289 = vld [vmem:[%s1267 + $0xa8] sm:$0xff]
    %v1290 = vld [vmem:[%s1267 + $0xb0] sm:$0xff]
    %v1291 = vld [vmem:[%s1267 + $0xb8] sm:$0xff]
    %v1292 = vld [vmem:[%s1267 + $0xc0] sm:$0xff]
    %v1293 = vld [vmem:[%s1267 + $0xc8] sm:$0xff]
    %v1294 = vld [vmem:[%s1267 + $0xd0] sm:$0xff]
    %v1295 = vld [vmem:[%s1267 + $0xd8] sm:$0xff]
    %v1296 = vld [vmem:[%s1267 + $0xe0] sm:$0xff]
    %v1297 = vld [vmem:[%s1267 + $0xe8] sm:$0xff]
    %v1298 = vld [vmem:[%s1267 + $0xf0] sm:$0xff]
    %v1299 = vld [vmem:[%s1267 + $0xf8] sm:$0xff]
    %1300 = vmatpush.msra.mxu0 %v1298
    %1301 = vmatpush.msra.mxu0 %v1296
    %1302 = vmatpush.msra.mxu0 %v1294
    %1303 = vmatpush.msra.mxu0 %v1292
    %1304 = vmatpush.msra.mxu0 %v1290
    %1305 = vmatpush.msra.mxu0 %v1288
    %1306 = vmatpush.msra.mxu0 %v1286
    %1307 = vmatpush.msra.mxu0 %v1284
    %1308 = vmatpush.msra.mxu0 %v1282
    %1309 = vmatpush.msra.mxu0 %v1280
    %1310 = vmatpush.msra.mxu0 %v1278
    %1311 = vmatpush.msra.mxu0 %v1276
    %1312 = vmatpush.msra.mxu0 %v1274
    %1313 = vmatpush.msra.mxu0 %v1272
    %1314 = vmatpush.msra.mxu0 %v1270
    %1315 = vmatpush.msra.mxu0 %v1268
    %1316 = vmatmul.f32.gmra.mxu0 %v1265
    %v1317 = vpop.f32.mrf.mxu0
    %v1318 = vadd.f32 0.0, %v1317
    %1319 = vmatmul.f32.gmra.mxu0 %v1266
    %v1320 = vpop.f32.mrf.mxu0
    %v1321 = vadd.f32 0.0, %v1320
    %1322 = vdwg.mxu0
    %1323 = vmatpush.msra.mxu0 %v1299
    %1324 = vmatpush.msra.mxu0 %v1297
    %1325 = vmatpush.msra.mxu0 %v1295
    %1326 = vmatpush.msra.mxu0 %v1293
    %1327 = vmatpush.msra.mxu0 %v1291
    %1328 = vmatpush.msra.mxu0 %v1289
    %1329 = vmatpush.msra.mxu0 %v1287
    %1330 = vmatpush.msra.mxu0 %v1285
    %1331 = vmatpush.msra.mxu0 %v1283
    %1332 = vmatpush.msra.mxu0 %v1281
    %1333 = vmatpush.msra.mxu0 %v1279
    %1334 = vmatpush.msra.mxu0 %v1277
    %1335 = vmatpush.msra.mxu0 %v1275
    %1336 = vmatpush.msra.mxu0 %v1273
    %1337 = vmatpush.msra.mxu0 %v1271
    %1338 = vmatpush.msra.mxu0 %v1269
    %1339 = vmatmul.f32.gmra.mxu0 %v1265
    %v1340 = vpop.f32.mrf.mxu0
    %v1341 = vadd.f32 0.0, %v1340
    %1342 = vmatmul.f32.gmra.mxu0 %v1266
    %v1343 = vpop.f32.mrf.mxu0
    %v1344 = vadd.f32 0.0, %v1343
    %1345 = vdwg.mxu0
    %v1346 = vadd.f32 %v1253, %v1318
    %v1347 = vadd.f32 %v1254, %v1341
    %v1348 = vadd.f32 %v1255, %v1321
    %v1349 = vadd.f32 %v1256, %v1344
    %v1350 = vld [vmem:[%s4] sm:$0x3]
    %v1352 = vperm.slane %v1350, 0
    %v1353 = vperm.slane %v1350, 1
    %v1356 = vadd.f32 %v1346, %v1352
    %v1357 = vadd.f32 %v1347, %v1353
    %v1358 = vadd.f32 %v1348, %v1352
    %v1359 = vadd.f32 %v1349, %v1353
    %v1360 = vxor.u32 %v1356, 2147483648
    %v1361 = vxor.u32 %v1357, 2147483648
    %v1362 = vxor.u32 %v1358, 2147483648
    %v1363 = vxor.u32 %v1359, 2147483648
    %v1364 = vmul.f32 %v1360, 1.442695
    %v1365 = vpow.pop %v1364
    %v1366 = vmul.f32 %v1361, 1.442695
    %v1367 = vpow.pop %v1366
    %v1368 = vmul.f32 %v1362, 1.442695
    %v1369 = vpow.pop %v1368
    %v1370 = vmul.f32 %v1363, 1.442695
    %v1371 = vpow.pop %v1370
    %v1372 = vadd.f32 %v1365, 1.0
    %v1373 = vadd.f32 %v1367, 1.0
    %v1374 = vadd.f32 %v1369, 1.0
    %v1375 = vadd.f32 %v1371, 1.0
    %v1376 = vrcp.pop %v1372
    %v1377 = vmul.f32 %v1372, %v1376
    %v1378 = vsub.f32 1.0, %v1377
    %v1379 = vmul.f32 %v1376, %v1378
    %v1380 = vadd.f32 %v1376, %v1379
    %vm1381 = vweird.f32 %v1372
    %vm1382 = vweird.f32 %v1376
    %vm1383 = vmor %vm1381, %vm1382
    %v1384 = vsel %vm1383, %v1376, %v1380
    %v1385 = vand.u32 2147483647, %v1372
    %vm1386 = vcmp.eq.f32.partialorder %v1385, 8.507059e+37
    %v1387 = vand.u32 %v1372, 2147483648
    %v1388 = vor.u32 1.1754944e-38, %v1387
    %v1389 = vsel %vm1386, %v1388, %v1384
    %v1390 = vmul.f32 1.0, %v1389
    %v1391 = vrcp.pop %v1373
    %v1392 = vmul.f32 %v1373, %v1391
    %v1393 = vsub.f32 1.0, %v1392
    %v1394 = vmul.f32 %v1391, %v1393
    %v1395 = vadd.f32 %v1391, %v1394
    %vm1396 = vweird.f32 %v1373
    %vm1397 = vweird.f32 %v1391
    %vm1398 = vmor %vm1396, %vm1397
    %v1399 = vsel %vm1398, %v1391, %v1395
    %v1400 = vand.u32 2147483647, %v1373
    %vm1401 = vcmp.eq.f32.partialorder %v1400, 8.507059e+37
    %v1402 = vand.u32 %v1373, 2147483648
    %v1403 = vor.u32 1.1754944e-38, %v1402
    %v1404 = vsel %vm1401, %v1403, %v1399
    %v1405 = vmul.f32 1.0, %v1404
    %v1406 = vrcp.pop %v1374
    %v1407 = vmul.f32 %v1374, %v1406
    %v1408 = vsub.f32 1.0, %v1407
    %v1409 = vmul.f32 %v1406, %v1408
    %v1410 = vadd.f32 %v1406, %v1409
    %vm1411 = vweird.f32 %v1374
    %vm1412 = vweird.f32 %v1406
    %vm1413 = vmor %vm1411, %vm1412
    %v1414 = vsel %vm1413, %v1406, %v1410
    %v1415 = vand.u32 2147483647, %v1374
    %vm1416 = vcmp.eq.f32.partialorder %v1415, 8.507059e+37
    %v1417 = vand.u32 %v1374, 2147483648
    %v1418 = vor.u32 1.1754944e-38, %v1417
    %v1419 = vsel %vm1416, %v1418, %v1414
    %v1420 = vmul.f32 1.0, %v1419
    %v1421 = vrcp.pop %v1375
    %v1422 = vmul.f32 %v1375, %v1421
    %v1423 = vsub.f32 1.0, %v1422
    %v1424 = vmul.f32 %v1421, %v1423
    %v1425 = vadd.f32 %v1421, %v1424
    %vm1426 = vweird.f32 %v1375
    %vm1427 = vweird.f32 %v1421
    %vm1428 = vmor %vm1426, %vm1427
    %v1429 = vsel %vm1428, %v1421, %v1425
    %v1430 = vand.u32 2147483647, %v1375
    %vm1431 = vcmp.eq.f32.partialorder %v1430, 8.507059e+37
    %v1432 = vand.u32 %v1375, 2147483648
    %v1433 = vor.u32 1.1754944e-38, %v1432
    %v1434 = vsel %vm1431, %v1433, %v1429
    %v1435 = vmul.f32 1.0, %v1434
    %v1436 = vmax.f32 %v1390, %v1405
    %v1437 = vmax.f32 %v1420, %v1435
    %1438 = vst [vmem:[#allocation3] sm:$0xff] %v1436
    %1439 = vst [vmem:[#allocation3 + $0x8] sm:$0xff] %v1437
    %v1440 = vld [vmem:[%s6] sm:$0x1]
    %v1441 = vld [vmem:[#allocation3] sm:$0x1]
    %v1442 = vld [vmem:[#allocation3 + $0x8] sm:$0x1]
    %v1443 = vld [vmem:[#allocation3 + $0x1] sm:$0x1]
    %v1444 = vld [vmem:[#allocation3 + $0x9] sm:$0x1]
    %v1445 = vmax.f32 %v1441, %v1443
    %v1446 = vmax.f32 %v1442, %v1444
    %v1447 = vld [vmem:[%s5] sm:$0xff]
    %v1448 = vld [vmem:[%s5 + $0x8] sm:$0xff]
    %v1449 = vld [vmem:[%s5 + $0x10] sm:$0xff]
    %v1450 = vld [vmem:[%s5 + $0x18] sm:$0xff]
    %v1451 = vld [vmem:[%s5 + $0x20] sm:$0xff]
    %v1452 = vld [vmem:[%s5 + $0x28] sm:$0xff]
    %v1453 = vld [vmem:[%s5 + $0x30] sm:$0xff]
    %v1454 = vld [vmem:[%s5 + $0x38] sm:$0xff]
    %v1455 = vld [vmem:[%s5 + $0x40] sm:$0xff]
    %v1456 = vld [vmem:[%s5 + $0x48] sm:$0xff]
    %v1457 = vld [vmem:[%s5 + $0x50] sm:$0xff]
    %v1458 = vld [vmem:[%s5 + $0x58] sm:$0xff]
    %v1459 = vld [vmem:[%s5 + $0x60] sm:$0xff]
    %v1460 = vld [vmem:[%s5 + $0x68] sm:$0xff]
    %v1461 = vld [vmem:[%s5 + $0x70] sm:$0xff]
    %v1462 = vld [vmem:[%s5 + $0x78] sm:$0xff]
    %v1465 = vrot.slane %v1446, 7
    %vm1466 = vcmask 1041409
    %v1467 = vsel %vm1466, %v1465, %v1445
    %1469 = vmatpush.msra.mxu0 %v1462
    %1470 = vmatpush.msra.mxu0 %v1461
    %1471 = vmatpush.msra.mxu0 %v1460
    %1472 = vmatpush.msra.mxu0 %v1459
    %1473 = vmatpush.msra.mxu0 %v1458
    %1474 = vmatpush.msra.mxu0 %v1457
    %1475 = vmatpush.msra.mxu0 %v1456
    %1476 = vmatpush.msra.mxu0 %v1455
    %1477 = vmatpush.msra.mxu0 %v1454
    %1478 = vmatpush.msra.mxu0 %v1453
    %1479 = vmatpush.msra.mxu0 %v1452
    %1480 = vmatpush.msra.mxu0 %v1451
    %1481 = vmatpush.msra.mxu0 %v1450
    %1482 = vmatpush.msra.mxu0 %v1449
    %1483 = vmatpush.msra.mxu0 %v1448
    %1484 = vmatpush.msra.mxu0 %v1447
    %1485 = vmatmul.f32.gmra.mxu0 %v1467
    %v1486 = vpop.f32.mrf.mxu0
    %v1487 = vadd.f32 0.0, %v1486
    %1488 = vdwg.mxu0
    %v1490 = vperm.slane %v1440, 0
    %v1492 = vadd.f32 %v1490, %v1487
    %v1493 = vld [vmem:[#allocation3 + $0x2] sm:$0x1]
    %v1494 = vld [vmem:[#allocation3 + $0xa] sm:$0x1]
    %v1495 = vld [vmem:[#allocation3 + $0x3] sm:$0x1]
    %v1496 = vld [vmem:[#allocation3 + $0xb] sm:$0x1]
    %v1497 = vmax.f32 %v1493, %v1495
    %v1498 = vmax.f32 %v1494, %v1496
    %s1499 = scalar_lea.vmem %s5, 128
    %v1500 = vld [vmem:[%s1499] sm:$0xff]
    %v1501 = vld [vmem:[%s1499 + $0x8] sm:$0xff]
    %v1502 = vld [vmem:[%s1499 + $0x10] sm:$0xff]
    %v1503 = vld [vmem:[%s1499 + $0x18] sm:$0xff]
    %v1504 = vld [vmem:[%s1499 + $0x20] sm:$0xff]
    %v1505 = vld [vmem:[%s1499 + $0x28] sm:$0xff]
    %v1506 = vld [vmem:[%s1499 + $0x30] sm:$0xff]
    %v1507 = vld [vmem:[%s1499 + $0x38] sm:$0xff]
    %v1508 = vld [vmem:[%s1499 + $0x40] sm:$0xff]
    %v1509 = vld [vmem:[%s1499 + $0x48] sm:$0xff]
    %v1510 = vld [vmem:[%s1499 + $0x50] sm:$0xff]
    %v1511 = vld [vmem:[%s1499 + $0x58] sm:$0xff]
    %v1512 = vld [vmem:[%s1499 + $0x60] sm:$0xff]
    %v1513 = vld [vmem:[%s1499 + $0x68] sm:$0xff]
    %v1514 = vld [vmem:[%s1499 + $0x70] sm:$0xff]
    %v1515 = vld [vmem:[%s1499 + $0x78] sm:$0xff]
    %v1518 = vrot.slane %v1498, 7
    %v1519 = vsel %vm1466, %v1518, %v1497
    %1521 = vmatpush.msra.mxu0 %v1515
    %1522 = vmatpush.msra.mxu0 %v1514
    %1523 = vmatpush.msra.mxu0 %v1513
    %1524 = vmatpush.msra.mxu0 %v1512
    %1525 = vmatpush.msra.mxu0 %v1511
    %1526 = vmatpush.msra.mxu0 %v1510
    %1527 = vmatpush.msra.mxu0 %v1509
    %1528 = vmatpush.msra.mxu0 %v1508
    %1529 = vmatpush.msra.mxu0 %v1507
    %1530 = vmatpush.msra.mxu0 %v1506
    %1531 = vmatpush.msra.mxu0 %v1505
    %1532 = vmatpush.msra.mxu0 %v1504
    %1533 = vmatpush.msra.mxu0 %v1503
    %1534 = vmatpush.msra.mxu0 %v1502
    %1535 = vmatpush.msra.mxu0 %v1501
    %1536 = vmatpush.msra.mxu0 %v1500
    %1537 = vmatmul.f32.gmra.mxu0 %v1519
    %v1538 = vpop.f32.mrf.mxu0
    %v1539 = vadd.f32 0.0, %v1538
    %1540 = vdwg.mxu0
    %v1541 = vadd.f32 %v1492, %v1539
    %v1542 = vld [vmem:[#allocation3 + $0x4] sm:$0x1]
    %v1543 = vld [vmem:[#allocation3 + $0xc] sm:$0x1]
    %v1544 = vld [vmem:[#allocation3 + $0x5] sm:$0x1]
    %v1545 = vld [vmem:[#allocation3 + $0xd] sm:$0x1]
    %v1546 = vmax.f32 %v1542, %v1544
    %v1547 = vmax.f32 %v1543, %v1545
    %s1548 = scalar_lea.vmem %s5, 256
    %v1549 = vld [vmem:[%s1548] sm:$0xff]
    %v1550 = vld [vmem:[%s1548 + $0x8] sm:$0xff]
    %v1551 = vld [vmem:[%s1548 + $0x10] sm:$0xff]
    %v1552 = vld [vmem:[%s1548 + $0x18] sm:$0xff]
    %v1553 = vld [vmem:[%s1548 + $0x20] sm:$0xff]
    %v1554 = vld [vmem:[%s1548 + $0x28] sm:$0xff]
    %v1555 = vld [vmem:[%s1548 + $0x30] sm:$0xff]
    %v1556 = vld [vmem:[%s1548 + $0x38] sm:$0xff]
    %v1557 = vld [vmem:[%s1548 + $0x40] sm:$0xff]
    %v1558 = vld [vmem:[%s1548 + $0x48] sm:$0xff]
    %v1559 = vld [vmem:[%s1548 + $0x50] sm:$0xff]
    %v1560 = vld [vmem:[%s1548 + $0x58] sm:$0xff]
    %v1561 = vld [vmem:[%s1548 + $0x60] sm:$0xff]
    %v1562 = vld [vmem:[%s1548 + $0x68] sm:$0xff]
    %v1563 = vld [vmem:[%s1548 + $0x70] sm:$0xff]
    %v1564 = vld [vmem:[%s1548 + $0x78] sm:$0xff]
    %v1567 = vrot.slane %v1547, 7
    %v1568 = vsel %vm1466, %v1567, %v1546
    %1570 = vmatpush.msra.mxu0 %v1564
    %1571 = vmatpush.msra.mxu0 %v1563
    %1572 = vmatpush.msra.mxu0 %v1562
    %1573 = vmatpush.msra.mxu0 %v1561
    %1574 = vmatpush.msra.mxu0 %v1560
    %1575 = vmatpush.msra.mxu0 %v1559
    %1576 = vmatpush.msra.mxu0 %v1558
    %1577 = vmatpush.msra.mxu0 %v1557
    %1578 = vmatpush.msra.mxu0 %v1556
    %1579 = vmatpush.msra.mxu0 %v1555
    %1580 = vmatpush.msra.mxu0 %v1554
    %1581 = vmatpush.msra.mxu0 %v1553
    %1582 = vmatpush.msra.mxu0 %v1552
    %1583 = vmatpush.msra.mxu0 %v1551
    %1584 = vmatpush.msra.mxu0 %v1550
    %1585 = vmatpush.msra.mxu0 %v1549
    %1586 = vmatmul.f32.gmra.mxu0 %v1568
    %v1587 = vpop.f32.mrf.mxu0
    %v1588 = vadd.f32 0.0, %v1587
    %1589 = vdwg.mxu0
    %v1590 = vadd.f32 %v1541, %v1588
    %v1591 = vld [vmem:[#allocation3 + $0x6] sm:$0x1]
    %v1592 = vld [vmem:[#allocation3 + $0xe] sm:$0x1]
    %v1593 = vld [vmem:[#allocation3 + $0x7] sm:$0x1]
    %v1594 = vld [vmem:[#allocation3 + $0xf] sm:$0x1]
    %v1595 = vmax.f32 %v1591, %v1593
    %v1596 = vmax.f32 %v1592, %v1594
    %s1597 = scalar_lea.vmem %s5, 384
    %v1598 = vld [vmem:[%s1597] sm:$0xff]
    %v1599 = vld [vmem:[%s1597 + $0x8] sm:$0xff]
    %v1600 = vld [vmem:[%s1597 + $0x10] sm:$0xff]
    %v1601 = vld [vmem:[%s1597 + $0x18] sm:$0xff]
    %v1602 = vld [vmem:[%s1597 + $0x20] sm:$0xff]
    %v1603 = vld [vmem:[%s1597 + $0x28] sm:$0xff]
    %v1604 = vld [vmem:[%s1597 + $0x30] sm:$0xff]
    %v1605 = vld [vmem:[%s1597 + $0x38] sm:$0xff]
    %v1606 = vld [vmem:[%s1597 + $0x40] sm:$0xff]
    %v1607 = vld [vmem:[%s1597 + $0x48] sm:$0xff]
    %v1608 = vld [vmem:[%s1597 + $0x50] sm:$0xff]
    %v1609 = vld [vmem:[%s1597 + $0x58] sm:$0xff]
    %v1610 = vld [vmem:[%s1597 + $0x60] sm:$0xff]
    %v1611 = vld [vmem:[%s1597 + $0x68] sm:$0xff]
    %v1612 = vld [vmem:[%s1597 + $0x70] sm:$0xff]
    %v1613 = vld [vmem:[%s1597 + $0x78] sm:$0xff]
    %v1616 = vrot.slane %v1596, 7
    %v1617 = vsel %vm1466, %v1616, %v1595
    %1619 = vmatpush.msra.mxu0 %v1613
    %1620 = vmatpush.msra.mxu0 %v1612
    %1621 = vmatpush.msra.mxu0 %v1611
    %1622 = vmatpush.msra.mxu0 %v1610
    %1623 = vmatpush.msra.mxu0 %v1609
    %1624 = vmatpush.msra.mxu0 %v1608
    %1625 = vmatpush.msra.mxu0 %v1607
    %1626 = vmatpush.msra.mxu0 %v1606
    %1627 = vmatpush.msra.mxu0 %v1605
    %1628 = vmatpush.msra.mxu0 %v1604
    %1629 = vmatpush.msra.mxu0 %v1603
    %1630 = vmatpush.msra.mxu0 %v1602
    %1631 = vmatpush.msra.mxu0 %v1601
    %1632 = vmatpush.msra.mxu0 %v1600
    %1633 = vmatpush.msra.mxu0 %v1599
    %1634 = vmatpush.msra.mxu0 %v1598
    %1635 = vmatmul.f32.gmra.mxu0 %v1617
    %v1636 = vpop.f32.mrf.mxu0
    %v1637 = vadd.f32 0.0, %v1636
    %1638 = vdwg.mxu0
    %v1639 = vadd.f32 %v1590, %v1637
    %v1640 = vxor.u32 %v1639, 2147483648
    %v1641 = vmul.f32 %v1640, 1.442695
    %v1642 = vpow.pop %v1641
    %v1643 = vadd.f32 %v1642, 1.0
    %v1644 = vrcp.pop %v1643
    %v1645 = vmul.f32 %v1643, %v1644
    %v1646 = vsub.f32 1.0, %v1645
    %v1647 = vmul.f32 %v1644, %v1646
    %v1648 = vadd.f32 %v1644, %v1647
    %vm1649 = vweird.f32 %v1643
    %vm1650 = vweird.f32 %v1644
    %vm1651 = vmor %vm1649, %vm1650
    %v1652 = vsel %vm1651, %v1644, %v1648
    %v1653 = vand.u32 2147483647, %v1643
    %vm1654 = vcmp.eq.f32.partialorder %v1653, 8.507059e+37
    %v1655 = vand.u32 %v1643, 2147483648
    %v1656 = vor.u32 1.1754944e-38, %v1655
    %v1657 = vsel %vm1654, %v1656, %v1652
    %v1658 = vmul.f32 1.0, %v1657
    %v1659 = vld [vmem:[%s7] sm:$0xff]
    %v1660 = vld [vmem:[%s7 + $0x8] sm:$0xff]
    %v1661 = vld [vmem:[%s7 + $0x10] sm:$0xff]
    %v1662 = vld [vmem:[%s7 + $0x18] sm:$0xff]
    %v1663 = vld [vmem:[%s7 + $0x20] sm:$0xff]
    %v1664 = vld [vmem:[%s7 + $0x28] sm:$0xff]
    %v1665 = vld [vmem:[%s7 + $0x30] sm:$0xff]
    %v1666 = vld [vmem:[%s7 + $0x38] sm:$0xff]
    %v1667 = vld [vmem:[%s7 + $0x40] sm:$0xff]
    %v1668 = vld [vmem:[%s7 + $0x48] sm:$0xff]
    %v1669 = vld [vmem:[%s7 + $0x50] sm:$0xff]
    %v1670 = vld [vmem:[%s7 + $0x58] sm:$0xff]
    %v1671 = vld [vmem:[%s7 + $0x60] sm:$0xff]
    %v1672 = vld [vmem:[%s7 + $0x68] sm:$0xff]
    %v1673 = vld [vmem:[%s7 + $0x70] sm:$0xff]
    %v1674 = vld [vmem:[%s8] sm:$0x1]
    %v1676 = vperm.slane %v1674, 0
    %vm1678 = vcmask 982016
    %v1680 = vsel %vm1678, %v1658, 0
    %1682 = vmatpush.msra.mxu0 0.0
    %1683 = vmatpush.msra.mxu0 %v1673
    %1684 = vmatpush.msra.mxu0 %v1672
    %1685 = vmatpush.msra.mxu0 %v1671
    %1686 = vmatpush.msra.mxu0 %v1670
    %1687 = vmatpush.msra.mxu0 %v1669
    %1688 = vmatpush.msra.mxu0 %v1668
    %1689 = vmatpush.msra.mxu0 %v1667
    %1690 = vmatpush.msra.mxu0 %v1666
    %1691 = vmatpush.msra.mxu0 %v1665
    %1692 = vmatpush.msra.mxu0 %v1664
    %1693 = vmatpush.msra.mxu0 %v1663
    %1694 = vmatpush.msra.mxu0 %v1662
    %1695 = vmatpush.msra.mxu0 %v1661
    %1696 = vmatpush.msra.mxu0 %v1660
    %1697 = vmatpush.msra.mxu0 %v1659
    %1698 = vmatmul.f32.gmra.mxu0 %v1680
    %v1699 = vpop.f32.mrf.mxu0
    %v1700 = vadd.f32 %v1676, %v1699
    %1701 = vdwg.mxu0
    %v1702 = vxor.u32 %v1700, 2147483648
    %v1703 = vmul.f32 %v1702, 1.442695
    %v1704 = vpow.pop %v1703
    %v1705 = vadd.f32 %v1704, 1.0
    %v1706 = vrcp.pop %v1705
    %v1707 = vmul.f32 %v1705, %v1706
    %v1708 = vsub.f32 1.0, %v1707
    %v1709 = vmul.f32 %v1706, %v1708
    %v1710 = vadd.f32 %v1706, %v1709
    %vm1711 = vweird.f32 %v1705
    %vm1712 = vweird.f32 %v1706
    %vm1713 = vmor %vm1711, %vm1712
    %v1714 = vsel %vm1713, %v1706, %v1710
    %v1715 = vand.u32 2147483647, %v1705
    %vm1716 = vcmp.eq.f32.partialorder %v1715, 8.507059e+37
    %v1717 = vand.u32 %v1705, 2147483648
    %v1718 = vor.u32 1.1754944e-38, %v1717
    %v1719 = vsel %vm1716, %v1718, %v1714
    %v1720 = vmul.f32 1.0, %v1719
    %v1721 = vld [vmem:[%s9] sm:$0xff]
    %v1722 = vld [vmem:[%s9 + $0x8] sm:$0xff]
    %v1723 = vld [vmem:[%s9 + $0x10] sm:$0xff]
    %v1724 = vld [vmem:[%s9 + $0x18] sm:$0xff]
    %v1725 = vld [vmem:[%s9 + $0x20] sm:$0xff]
    %v1726 = vld [vmem:[%s9 + $0x28] sm:$0xff]
    %v1727 = vld [vmem:[%s9 + $0x30] sm:$0xff]
    %v1728 = vld [vmem:[%s9 + $0x38] sm:$0xff]
    %v1729 = vld [vmem:[%s9 + $0x40] sm:$0xff]
    %v1730 = vld [vmem:[%s9 + $0x48] sm:$0xff]
    %v1731 = vld [vmem:[%s9 + $0x50] sm:$0xf]
    %v1732 = vld [vmem:[%s10] sm:$0x1]
    %v1734 = vperm.slane %v1732, 0
    %vm1736 = vcmask 687104
    %v1738 = vsel %vm1736, %v1720, 0
    %v1741 = vsel %vm103, %v1731, 0
    %1743 = vmatpush.msra.mxu0 0.0
    %1744 = vmatpush.msra.mxu0 0.0
    %1745 = vmatpush.msra.mxu0 0.0
    %1746 = vmatpush.msra.mxu0 0.0
    %1747 = vmatpush.msra.mxu0 0.0
    %1748 = vmatpush.msra.mxu0 %v1741
    %1749 = vmatpush.msra.mxu0 %v1730
    %1750 = vmatpush.msra.mxu0 %v1729
    %1751 = vmatpush.msra.mxu0 %v1728
    %1752 = vmatpush.msra.mxu0 %v1727
    %1753 = vmatpush.msra.mxu0 %v1726
    %1754 = vmatpush.msra.mxu0 %v1725
    %1755 = vmatpush.msra.mxu0 %v1724
    %1756 = vmatpush.msra.mxu0 %v1723
    %1757 = vmatpush.msra.mxu0 %v1722
    %1758 = vmatpush.msra.mxu0 %v1721
    %1759 = vmatmul.f32.gmra.mxu0 %v1738
    %v1760 = vpop.f32.mrf.mxu0
    %v1761 = vadd.f32 %v1734, %v1760
    %1762 = vdwg.mxu0
    %1763 = vst [vmem:[#allocation7] sm:$0x3] %v1761
    // Predicated region
    $region50: #{lenet_pallas_forward.1} parent=1 // pred_check
      _
    $region51: #{lenet_pallas_forward.1} parent=1 // pred_check_branch
      %1765 = sbr.rel (0) target = $region53
    $region52: #{lenet_pallas_forward.1} parent=1 // pred_region
      %1767 = vsyncadd [#allocation6], 0
      %s1769 = sshll.u32 [#allocation7], 4
      %s1770 = int_to_ptr.vmem [resolvable:$true] %s1769
      %s1771 = sshll.u32 %s11, 4
      %s1772 = int_to_ptr.hbm [resolvable:$true] %s1771
      %1774 = dma.vmem_to_hbm [thread:$0]  %s1770, 32, %s1772, [#allocation6]
    $region53: #{lenet_pallas_forward.1} parent=1 // pred_fallthru
      _
    // Predicated region
    $region54: #{lenet_pallas_forward.1} parent=1 // pred_check
      _
    $region55: #{lenet_pallas_forward.1} parent=1 // pred_check_branch
      %1776 = sbr.rel (0) target = $region57
    $region56: #{lenet_pallas_forward.1} parent=1 // pred_region
      %1778 = dma.done [#allocation6], 32
    $region57: #{lenet_pallas_forward.1} parent=1 // pred_fallthru
      _
    %1779 = vsyncpa [#allocation5], 1
    %1780 = vsyncpa [#allocation6], 1

</llo_original>
